<compile_context>
chip_gen: v6e
topology: v6e:2x2x1
jax: 0.10.0
libtpu: 0.0.40
codegen_flags: <defaults>
</compile_context>

<pallas_src>
import functools

import jax
import jax.numpy as jnp
from jax.experimental import pallas as pl
from jax.experimental.pallas import tpu as pltpu


def _round_up(v, m):
    return (v + m - 1) // m * m


def _pick_group(kernel_size):
    """Group size g for two-level window sums (~g + k/g VMEM loads/element)."""
    k = kernel_size
    if k <= 6:
        return 1
    best_g, best_cost = 1, k  # g == 1 -> direct k-load path, no scratch
    for g in range(2, k + 1):
        cost = g + k // g + (k % g) + 1  # ps build + window loads + ps store
        if cost < best_cost:
            best_g, best_cost = g, cost
    return best_g


def _decomp_kernel(x_ref, res_ref, mean_ref, ps_ref, *,
                   kernel_size, pad, seq_len, row_chunk, group):
    """One (batch, lane-tile) block of fused series_decomp (stride=1, odd k).

    x_ref    : (L, TC)       input block  (time on sublanes, channels on lanes)
    res_ref  : (L, TC)       output: x - moving_mean
    mean_ref : (L, TC)       output: moving_mean
    ps_ref   : (ps_rows, TC) f32 scratch: ps[t] = sum_{w<g} x[t+w] (unused g==1)

    All loop bounds and slice starts are static Python ints, so the chunk loops
    below are fully unrolled and the output stores are 8-sublane aligned.
    """
    k, L, g = kernel_size, seq_len, group
    inv_k = jnp.float32(1.0 / k)
    m_groups = k // g
    rem = k - m_groups * g

    # ---- Phase 1: grouped partial sums ps[t] = sum_{w<g} x[t+w] (g > 1 only).
    n_ps = L - g + 1
    if g > 1:
        def ps_chunk(row0, rows):
            acc = x_ref[pl.ds(row0, rows), :].astype(jnp.float32)
            for w in range(1, g):
                acc = acc + x_ref[pl.ds(row0 + w, rows), :].astype(jnp.float32)
            ps_ref[pl.ds(row0, rows), :] = acc

        for i in range(n_ps // row_chunk):
            ps_chunk(i * row_chunk, row_chunk)
        tail = n_ps % row_chunk
        if tail:
            ps_chunk(n_ps - tail, tail)

    # ---- Phase 2: interior rows t in [t_lo, L - pad): full windows, chunked,
    #      residual fused into the same pass.
    def interior_chunk(t0, rows):
        s0 = t0 - pad  # window start in x coordinates
        if g > 1:
            acc = ps_ref[pl.ds(s0, rows), :]
            for j in range(1, m_groups):
                acc = acc + ps_ref[pl.ds(s0 + j * g, rows), :]
        else:
            acc = x_ref[pl.ds(s0, rows), :].astype(jnp.float32)
            for j in range(1, m_groups):
                acc = acc + x_ref[pl.ds(s0 + j, rows), :].astype(jnp.float32)
        for j in range(rem):
            acc = acc + x_ref[pl.ds(s0 + m_groups * g + j, rows), :].astype(jnp.float32)
        mean = acc * inv_k
        xv = x_ref[pl.ds(t0, rows), :].astype(jnp.float32)
        mean_ref[pl.ds(t0, rows), :] = mean.astype(mean_ref.dtype)
        res_ref[pl.ds(t0, rows), :] = (xv - mean).astype(res_ref.dtype)

    t_lo = min(_round_up(pad, 8), max(L - pad, 0))
    n_int = max(0, (L - pad) - t_lo)
    for i in range(n_int // row_chunk):
        interior_chunk(t_lo + i * row_chunk, row_chunk)
    tail = n_int % row_chunk
    if tail:
        interior_chunk(t_lo + n_int - tail, tail)

    # ---- Phase 3: boundary rows (replicate padding), per-row closed form.
    #      At most ~pad+7 rows at each end -> no padded slab needed.
    def boundary_row(t):
        lo = max(t - pad, 0)
        hi = min(t + (k - 1 - pad), L - 1)
        n_lo = lo - (t - pad)               # replicated copies of x[0]
        n_hi = (t + (k - 1 - pad)) - hi     # replicated copies of x[L-1]
        win = x_ref[pl.ds(lo, hi - lo + 1), :].astype(jnp.float32)
        acc = jnp.sum(win, axis=0, keepdims=True)
        if n_lo:
            acc = acc + jnp.float32(n_lo) * x_ref[pl.ds(0, 1), :].astype(jnp.float32)
        if n_hi:
            acc = acc + jnp.float32(n_hi) * x_ref[pl.ds(L - 1, 1), :].astype(jnp.float32)
        mean = acc * inv_k
        xv = x_ref[pl.ds(t, 1), :].astype(jnp.float32)
        mean_ref[pl.ds(t, 1), :] = mean.astype(mean_ref.dtype)
        res_ref[pl.ds(t, 1), :] = (xv - mean).astype(res_ref.dtype)

    for t in range(t_lo):
        boundary_row(t)
    for t in range(max(L - pad, t_lo), L):
        boundary_row(t)


def series_decomp(x, kernel_size, *, lane_tile=None):
    """Fused DLinear series decomposition: (B, L, C) -> (res, moving_mean)."""
    if kernel_size < 1 or kernel_size % 2 == 0:
        raise ValueError("fused series_decomp requires an odd kernel_size "
                         "(the DLinear Model uses stride=1 / odd moving_avg).")
    B, L, C = x.shape
    k = kernel_size
    pad = (k - 1) // 2
    g = _pick_group(k)
    itemsize = jnp.dtype(x.dtype).itemsize

    # VMEM per lane-column of a tile: double-buffered input + two double-
    # buffered outputs + the f32 partial-sum scratch. Budget keeps the per-tile
    # working set well inside v7x's 64 MiB VMEM.
    bytes_per_col = (2 + 2 + 2) * L * itemsize + (L * 4 if g > 1 else 0)
    budget = 20 * 1024 * 1024

    if C % 128 == 0:
        if lane_tile is not None and C % lane_tile == 0 and lane_tile % 128 == 0:
            tc = lane_tile
        else:
            tc = max(128, min((budget // bytes_per_col) // 128 * 128, 512))
            tc = min(tc, C)
            while C % tc != 0:
                tc -= 128
    else:
        if C > 256 and bytes_per_col * C > budget:
            # Ragged large C: pad channels to a 128 multiple so the lane-tiled
            # grid still engages instead of one giant VMEM-blowing block.
            Cp = _round_up(C, 128)
            xp = jnp.pad(x, ((0, 0), (0, 0), (0, Cp - C)))
            res, mean = series_decomp(xp, kernel_size, lane_tile=lane_tile)
            return res[..., :C], mean[..., :C]
        tc = C  # small / ragged channel count: one full-width lane block

    row_chunk = max(8, min(64, (16384 // max(tc, 1)) // 8 * 8))
    ps_rows = (L - g + 1) if g > 1 else 8

    kernel = functools.partial(
        _decomp_kernel, kernel_size=k, pad=pad, seq_len=L,
        row_chunk=row_chunk, group=g)

    n_ct = C // tc
    block = (None, L, tc)            # batch squeezed; time on sublanes
    idx = lambda b, j: (b, 0, j)

    est_vmem = bytes_per_col * tc + (1 << 20)
    vmem_limit = int(min(max(32 * 1024 * 1024, 2 * est_vmem), 48 * 1024 * 1024))

    res, mean = pl.pallas_call(
        kernel,
        out_shape=(jax.ShapeDtypeStruct((B, L, C), x.dtype),
                   jax.ShapeDtypeStruct((B, L, C), x.dtype)),
        grid_spec=pltpu.PrefetchScalarGridSpec(
            num_scalar_prefetch=0,
            grid=(B, n_ct),          # both independent -> megacore / v7x cores
            in_specs=[pl.BlockSpec(block, idx)],
            out_specs=(pl.BlockSpec(block, idx), pl.BlockSpec(block, idx)),
            scratch_shapes=[pltpu.VMEM((ps_rows, tc), jnp.float32)],
        ),
        compiler_params=pltpu.CompilerParams(
            dimension_semantics=("parallel", "parallel"),
            vmem_limit_bytes=vmem_limit,
        ),
    )(x)
    return res, mean


def moving_avg(x, kernel_size, stride=1):
    """Moving-average (trend) block: only the stride=1 / odd-kernel config the
    Model actually uses is hand-written."""
    if stride != 1 or kernel_size % 2 == 0:
        # TODO(synk): generic stride>1 / even-kernel AvgPool1d path not needed
        # by the Model and not hand-written.
        raise NotImplementedError("Model only uses stride=1 with an odd kernel")
    return series_decomp(x, kernel_size)[1]


def dlinear_forecast(x, kernel_size, w_seasonal, b_seasonal, w_trend, b_trend):
    """DLinear Model.forward (forecast, individual=False): (B,L,C) -> (B,P,C)."""
    res, mean = series_decomp(x, kernel_size)
    # TODO(synk): seq_len->pred_len Linear heads are plain MXU matmuls / bias
    # adds left to XLA (individual=True per-channel heads likewise).
    seasonal = jnp.einsum('blc,pl->bpc', res, w_seasonal) + b_seasonal[None, :, None]
    trend = jnp.einsum('blc,pl->bpc', mean, w_trend) + b_trend[None, :, None]
    return seasonal + trend


def _series_decomp_ref(x, k):
    """Pure-JAX reference mirroring the PyTorch series_decomp.forward."""
    B, L, C = x.shape
    pad = (k - 1) // 2
    xf = x.astype(jnp.float32)
    front = jnp.repeat(xf[:, :1, :], pad, axis=1)
    end = jnp.repeat(xf[:, -1:, :], pad, axis=1)
    xp = jnp.concatenate([front, xf, end], axis=1)
    mean = jnp.stack([jnp.mean(xp[:, t:t + k, :], axis=1) for t in range(L)], axis=1)
    return (xf - mean).astype(x.dtype), mean.astype(x.dtype)


if __name__ == "__main__":
    key = jax.random.PRNGKey(0)
    cases = [
        # (B, L, C, kernel_size, dtype, lane_tile)
        (2, 32, 8, 25, jnp.float32, None),     # DLinear default kernel, tiny C
        (2, 64, 256, 25, jnp.float32, 128),    # lane-tiled path, grid (2, 2)
        (1, 40, 7, 7, jnp.float32, None),      # ETT-style channel count
        (2, 24, 8, 1, jnp.float32, None),      # k = 1 edge case (mean == x)
        (2, 48, 128, 25, jnp.bfloat16, None),  # bf16 I/O, f32 accumulation
    ]
    for i, (B, L, C, k, dtype, lt) in enumerate(cases):
        key, sub = jax.random.split(key)
        x = jax.random.normal(sub, (B, L, C), dtype=jnp.float32).astype(dtype)
        res, mean = jax.block_until_ready(series_decomp(x, k, lane_tile=lt))
        rres, rmean = _series_decomp_ref(x, k)
        tol = 1e-5 if dtype == jnp.float32 else 2e-2
        assert res.shape == x.shape and mean.shape == x.shape, (i, res.shape)
        assert jnp.allclose(mean.astype(jnp.float32), rmean.astype(jnp.float32),
                            atol=tol, rtol=tol), f"mean mismatch in case {i}"
        assert jnp.allclose(res.astype(jnp.float32), rres.astype(jnp.float32),
                            atol=tol, rtol=tol), f"res mismatch in case {i}"

    # Full DLinear forward (forecast, individual=False) on a small config.
    B, L, P, C, k = 2, 32, 16, 8, 25
    key, k1, k2, k3 = jax.random.split(key, 4)
    x = jax.random.normal(k1, (B, L, C), dtype=jnp.float32)
    w_s = jnp.full((P, L), 1.0 / L, jnp.float32) + 0.01 * jax.random.normal(k2, (P, L))
    w_t = jnp.full((P, L), 1.0 / L, jnp.float32) + 0.01 * jax.random.normal(k3, (P, L))
    b_s = jnp.zeros((P,), jnp.float32)
    b_t = jnp.zeros((P,), jnp.float32)
    out = jax.block_until_ready(dlinear_forecast(x, k, w_s, b_s, w_t, b_t))
    rres, rmean = _series_decomp_ref(x, k)
    ref_out = (jnp.einsum('blc,pl->bpc', rres, w_s) + b_s[None, :, None]
               + jnp.einsum('blc,pl->bpc', rmean, w_t) + b_t[None, :, None])
    assert out.shape == (B, P, C), out.shape
    assert jnp.allclose(out, ref_out, atol=1e-4, rtol=1e-4), "forecast mismatch"

    print("KERNEL_OK")
</pallas_src>

<mosaic_0001>
module attributes {stable_mosaic.version = 11 : i64} {
  func.func @_decomp_kernel(%arg0: i32, %arg1: i32, %arg2: memref<1x32x8xf32, #tpu.memory_space<vmem>>, %arg3: memref<1x32x8xf32, #tpu.memory_space<vmem>>, %arg4: memref<1x32x8xf32, #tpu.memory_space<vmem>>, %arg5: memref<28x8xf32, #tpu.memory_space<vmem>>) attributes {dimension_semantics = [#tpu.dimension_semantics<parallel>, #tpu.dimension_semantics<parallel>], iteration_bounds = array<i64: 2, 1>, scalar_prefetch = 0 : i64, scratch_operands = 1 : i64, tpu.core_type = #tpu.core_type<tc>, window_params = [{transform_indices = @transform_0, window_bounds = array<i64: 1, 32, 8>}, {transform_indices = @transform_1, window_bounds = array<i64: 1, 32, 8>}, {transform_indices = @transform_2, window_bounds = array<i64: 1, 32, 8>}]} {
    %c0 = arith.constant 0 : index
    %c0_0 = arith.constant 0 : index
    %c0_1 = arith.constant 0 : index
    %0 = vector.load %arg2[%c0, %c0_0, %c0_1] : memref<1x32x8xf32, #tpu.memory_space<vmem>>, vector<1x28x8xf32>
    %1 = vector.shape_cast %0 : vector<1x28x8xf32> to vector<28x8xf32>
    %c0_2 = arith.constant 0 : index
    %c1 = arith.constant 1 : index
    %c0_3 = arith.constant 0 : index
    %2 = vector.load %arg2[%c0_2, %c1, %c0_3] : memref<1x32x8xf32, #tpu.memory_space<vmem>>, vector<1x28x8xf32>
    %3 = vector.shape_cast %2 : vector<1x28x8xf32> to vector<28x8xf32>
    %4 = arith.addf %1, %3 : vector<28x8xf32>
    %c0_4 = arith.constant 0 : index
    %c2 = arith.constant 2 : index
    %c0_5 = arith.constant 0 : index
    %5 = vector.load %arg2[%c0_4, %c2, %c0_5] : memref<1x32x8xf32, #tpu.memory_space<vmem>>, vector<1x28x8xf32>
    %6 = vector.shape_cast %5 : vector<1x28x8xf32> to vector<28x8xf32>
    %7 = arith.addf %4, %6 : vector<28x8xf32>
    %c0_6 = arith.constant 0 : index
    %c3 = arith.constant 3 : index
    %c0_7 = arith.constant 0 : index
    %8 = vector.load %arg2[%c0_6, %c3, %c0_7] : memref<1x32x8xf32, #tpu.memory_space<vmem>>, vector<1x28x8xf32>
    %9 = vector.shape_cast %8 : vector<1x28x8xf32> to vector<28x8xf32>
    %10 = arith.addf %7, %9 : vector<28x8xf32>
    %c0_8 = arith.constant 0 : index
    %c4 = arith.constant 4 : index
    %c0_9 = arith.constant 0 : index
    %11 = vector.load %arg2[%c0_8, %c4, %c0_9] : memref<1x32x8xf32, #tpu.memory_space<vmem>>, vector<1x28x8xf32>
    %12 = vector.shape_cast %11 : vector<1x28x8xf32> to vector<28x8xf32>
    %13 = arith.addf %10, %12 : vector<28x8xf32>
    %c0_10 = arith.constant 0 : index
    %c0_11 = arith.constant 0 : index
    %14 = vector.load %arg5[%c0_10, %c0_11] : memref<28x8xf32, #tpu.memory_space<vmem>>, vector<28x8xf32>
    tpu.vector_store %arg5[%c0_10, %c0_11], %13 {strides = array<i32>} : memref<28x8xf32, #tpu.memory_space<vmem>>, vector<28x8xf32>,
    %c4_12 = arith.constant 4 : index
    %c0_13 = arith.constant 0 : index
    %15 = vector.load %arg5[%c4_12, %c0_13] : memref<28x8xf32, #tpu.memory_space<vmem>>, vector<4x8xf32>
    %c9 = arith.constant 9 : index
    %c0_14 = arith.constant 0 : index
    %16 = vector.load %arg5[%c9, %c0_14] : memref<28x8xf32, #tpu.memory_space<vmem>>, vector<4x8xf32>
    %17 = arith.addf %15, %16 : vector<4x8xf32>
    %c14 = arith.constant 14 : index
    %c0_15 = arith.constant 0 : index
    %18 = vector.load %arg5[%c14, %c0_15] : memref<28x8xf32, #tpu.memory_space<vmem>>, vector<4x8xf32>
    %19 = arith.addf %17, %18 : vector<4x8xf32>
    %c19 = arith.constant 19 : index
    %c0_16 = arith.constant 0 : index
    %20 = vector.load %arg5[%c19, %c0_16] : memref<28x8xf32, #tpu.memory_space<vmem>>, vector<4x8xf32>
    %21 = arith.addf %19, %20 : vector<4x8xf32>
    %c24 = arith.constant 24 : index
    %c0_17 = arith.constant 0 : index
    %22 = vector.load %arg5[%c24, %c0_17] : memref<28x8xf32, #tpu.memory_space<vmem>>, vector<4x8xf32>
    %23 = arith.addf %21, %22 : vector<4x8xf32>
    %cst = arith.constant 4.000000e-02 : f32
    %24 = vector.broadcast %cst : f32 to vector<4x8xf32>
    %25 = arith.mulf %23, %24 : vector<4x8xf32>
    %c0_18 = arith.constant 0 : index
    %c16 = arith.constant 16 : index
    %c0_19 = arith.constant 0 : index
    %26 = vector.load %arg2[%c0_18, %c16, %c0_19] : memref<1x32x8xf32, #tpu.memory_space<vmem>>, vector<1x4x8xf32>
    %27 = vector.shape_cast %26 : vector<1x4x8xf32> to vector<4x8xf32>
    %c0_20 = arith.constant 0 : index
    %c16_21 = arith.constant 16 : index
    %c0_22 = arith.constant 0 : index
    %28 = vector.load %arg4[%c0_20, %c16_21, %c0_22] : memref<1x32x8xf32, #tpu.memory_space<vmem>>, vector<1x4x8xf32>
    %29 = vector.shape_cast %28 : vector<1x4x8xf32> to vector<4x8xf32>
    %30 = vector.shape_cast %25 : vector<4x8xf32> to vector<1x4x8xf32>
    tpu.vector_store %arg4[%c0_20, %c16_21, %c0_22], %30 {strides = array<i32>} : memref<1x32x8xf32, #tpu.memory_space<vmem>>, vector<1x4x8xf32>,
    %31 = arith.subf %27, %25 : vector<4x8xf32>
    %c0_23 = arith.constant 0 : index
    %c16_24 = arith.constant 16 : index
    %c0_25 = arith.constant 0 : index
    %32 = vector.load %arg3[%c0_23, %c16_24, %c0_25] : memref<1x32x8xf32, #tpu.memory_space<vmem>>, vector<1x4x8xf32>
    %33 = vector.shape_cast %32 : vector<1x4x8xf32> to vector<4x8xf32>
    %34 = vector.shape_cast %31 : vector<4x8xf32> to vector<1x4x8xf32>
    tpu.vector_store %arg3[%c0_23, %c16_24, %c0_25], %34 {strides = array<i32>} : memref<1x32x8xf32, #tpu.memory_space<vmem>>, vector<1x4x8xf32>,
    %c0_26 = arith.constant 0 : index
    %c0_27 = arith.constant 0 : index
    %c0_28 = arith.constant 0 : index
    %35 = vector.load %arg2[%c0_26, %c0_27, %c0_28] : memref<1x32x8xf32, #tpu.memory_space<vmem>>, vector<1x13x8xf32>
    %36 = vector.shape_cast %35 : vector<1x13x8xf32> to vector<13x8xf32>
    %cst_29 = arith.constant dense<0.000000e+00> : vector<8xf32>
    %37 = vector.multi_reduction <add>, %36, %cst_29 [0] : vector<13x8xf32> to vector<8xf32>
    %38 = vector.shape_cast %37 : vector<8xf32> to vector<1x8xf32>
    %c0_30 = arith.constant 0 : index
    %c0_31 = arith.constant 0 : index
    %c0_32 = arith.constant 0 : index
    %39 = vector.load %arg2[%c0_30, %c0_31, %c0_32] : memref<1x32x8xf32, #tpu.memory_space<vmem>>, vector<1x1x8xf32>
    %40 = vector.shape_cast %39 : vector<1x1x8xf32> to vector<1x8xf32>
    %cst_33 = arith.constant 1.200000e+01 : f32
    %41 = vector.broadcast %cst_33 : f32 to vector<1x8xf32>
    %42 = arith.mulf %41, %40 : vector<1x8xf32>
    %43 = arith.addf %38, %42 : vector<1x8xf32>
    %cst_34 = arith.constant 4.000000e-02 : f32
    %44 = vector.broadcast %cst_34 : f32 to vector<1x8xf32>
    %45 = arith.mulf %43, %44 : vector<1x8xf32>
    %c0_35 = arith.constant 0 : index
    %c0_36 = arith.constant 0 : index
    %c0_37 = arith.constant 0 : index
    %46 = vector.load %arg2[%c0_35, %c0_36, %c0_37] : memref<1x32x8xf32, #tpu.memory_space<vmem>>, vector<1x1x8xf32>
    %47 = vector.shape_cast %46 : vector<1x1x8xf32> to vector<1x8xf32>
    %c0_38 = arith.constant 0 : index
    %c0_39 = arith.constant 0 : index
    %c0_40 = arith.constant 0 : index
    %48 = vector.load %arg4[%c0_38, %c0_39, %c0_40] : memref<1x32x8xf32, #tpu.memory_space<vmem>>, vector<1x1x8xf32>
    %49 = vector.shape_cast %48 : vector<1x1x8xf32> to vector<1x8xf32>
    %50 = vector.shape_cast %45 : vector<1x8xf32> to vector<1x1x8xf32>
    tpu.vector_store %arg4[%c0_38, %c0_39, %c0_40], %50 {strides = array<i32>} : memref<1x32x8xf32, #tpu.memory_space<vmem>>, vector<1x1x8xf32>,
    %51 = arith.subf %47, %45 : vector<1x8xf32>
    %c0_41 = arith.constant 0 : index
    %c0_42 = arith.constant 0 : index
    %c0_43 = arith.constant 0 : index
    %52 = vector.load %arg3[%c0_41, %c0_42, %c0_43] : memref<1x32x8xf32, #tpu.memory_space<vmem>>, vector<1x1x8xf32>
    %53 = vector.shape_cast %52 : vector<1x1x8xf32> to vector<1x8xf32>
    %54 = vector.shape_cast %51 : vector<1x8xf32> to vector<1x1x8xf32>
    tpu.vector_store %arg3[%c0_41, %c0_42, %c0_43], %54 {strides = array<i32>} : memref<1x32x8xf32, #tpu.memory_space<vmem>>, vector<1x1x8xf32>,
    %c0_44 = arith.constant 0 : index
    %c0_45 = arith.constant 0 : index
    %c0_46 = arith.constant 0 : index
    %55 = vector.load %arg2[%c0_44, %c0_45, %c0_46] : memref<1x32x8xf32, #tpu.memory_space<vmem>>, vector<1x14x8xf32>
    %56 = vector.shape_cast %55 : vector<1x14x8xf32> to vector<14x8xf32>
    %cst_47 = arith.constant dense<0.000000e+00> : vector<8xf32>
    %57 = vector.multi_reduction <add>, %56, %cst_47 [0] : vector<14x8xf32> to vector<8xf32>
    %58 = vector.shape_cast %57 : vector<8xf32> to vector<1x8xf32>
    %c0_48 = arith.constant 0 : index
    %c0_49 = arith.constant 0 : index
    %c0_50 = arith.constant 0 : index
    %59 = vector.load %arg2[%c0_48, %c0_49, %c0_50] : memref<1x32x8xf32, #tpu.memory_space<vmem>>, vector<1x1x8xf32>
    %60 = vector.shape_cast %59 : vector<1x1x8xf32> to vector<1x8xf32>
    %cst_51 = arith.constant 1.100000e+01 : f32
    %61 = vector.broadcast %cst_51 : f32 to vector<1x8xf32>
    %62 = arith.mulf %61, %60 : vector<1x8xf32>
    %63 = arith.addf %58, %62 : vector<1x8xf32>
    %cst_52 = arith.constant 4.000000e-02 : f32
    %64 = vector.broadcast %cst_52 : f32 to vector<1x8xf32>
    %65 = arith.mulf %63, %64 : vector<1x8xf32>
    %c0_53 = arith.constant 0 : index
    %c1_54 = arith.constant 1 : index
    %c0_55 = arith.constant 0 : index
    %66 = vector.load %arg2[%c0_53, %c1_54, %c0_55] : memref<1x32x8xf32, #tpu.memory_space<vmem>>, vector<1x1x8xf32>
    %67 = vector.shape_cast %66 : vector<1x1x8xf32> to vector<1x8xf32>
    %c0_56 = arith.constant 0 : index
    %c1_57 = arith.constant 1 : index
    %c0_58 = arith.constant 0 : index
    %68 = vector.load %arg4[%c0_56, %c1_57, %c0_58] : memref<1x32x8xf32, #tpu.memory_space<vmem>>, vector<1x1x8xf32>
    %69 = vector.shape_cast %68 : vector<1x1x8xf32> to vector<1x8xf32>
    %70 = vector.shape_cast %65 : vector<1x8xf32> to vector<1x1x8xf32>
    tpu.vector_store %arg4[%c0_56, %c1_57, %c0_58], %70 {strides = array<i32>} : memref<1x32x8xf32, #tpu.memory_space<vmem>>, vector<1x1x8xf32>,
    %71 = arith.subf %67, %65 : vector<1x8xf32>
    %c0_59 = arith.constant 0 : index
    %c1_60 = arith.constant 1 : index
    %c0_61 = arith.constant 0 : index
    %72 = vector.load %arg3[%c0_59, %c1_60, %c0_61] : memref<1x32x8xf32, #tpu.memory_space<vmem>>, vector<1x1x8xf32>
    %73 = vector.shape_cast %72 : vector<1x1x8xf32> to vector<1x8xf32>
    %74 = vector.shape_cast %71 : vector<1x8xf32> to vector<1x1x8xf32>
    tpu.vector_store %arg3[%c0_59, %c1_60, %c0_61], %74 {strides = array<i32>} : memref<1x32x8xf32, #tpu.memory_space<vmem>>, vector<1x1x8xf32>,
    %c0_62 = arith.constant 0 : index
    %c0_63 = arith.constant 0 : index
    %c0_64 = arith.constant 0 : index
    %75 = vector.load %arg2[%c0_62, %c0_63, %c0_64] : memref<1x32x8xf32, #tpu.memory_space<vmem>>, vector<1x15x8xf32>
    %76 = vector.shape_cast %75 : vector<1x15x8xf32> to vector<15x8xf32>
    %cst_65 = arith.constant dense<0.000000e+00> : vector<8xf32>
    %77 = vector.multi_reduction <add>, %76, %cst_65 [0] : vector<15x8xf32> to vector<8xf32>
    %78 = vector.shape_cast %77 : vector<8xf32> to vector<1x8xf32>
    %c0_66 = arith.constant 0 : index
    %c0_67 = arith.constant 0 : index
    %c0_68 = arith.constant 0 : index
    %79 = vector.load %arg2[%c0_66, %c0_67, %c0_68] : memref<1x32x8xf32, #tpu.memory_space<vmem>>, vector<1x1x8xf32>
    %80 = vector.shape_cast %79 : vector<1x1x8xf32> to vector<1x8xf32>
    %cst_69 = arith.constant 1.000000e+01 : f32
    %81 = vector.broadcast %cst_69 : f32 to vector<1x8xf32>
    %82 = arith.mulf %81, %80 : vector<1x8xf32>
    %83 = arith.addf %78, %82 : vector<1x8xf32>
    %cst_70 = arith.constant 4.000000e-02 : f32
    %84 = vector.broadcast %cst_70 : f32 to vector<1x8xf32>
    %85 = arith.mulf %83, %84 : vector<1x8xf32>
    %c0_71 = arith.constant 0 : index
    %c2_72 = arith.constant 2 : index
    %c0_73 = arith.constant 0 : index
    %86 = vector.load %arg2[%c0_71, %c2_72, %c0_73] : memref<1x32x8xf32, #tpu.memory_space<vmem>>, vector<1x1x8xf32>
    %87 = vector.shape_cast %86 : vector<1x1x8xf32> to vector<1x8xf32>
    %c0_74 = arith.constant 0 : index
    %c2_75 = arith.constant 2 : index
    %c0_76 = arith.constant 0 : index
    %88 = vector.load %arg4[%c0_74, %c2_75, %c0_76] : memref<1x32x8xf32, #tpu.memory_space<vmem>>, vector<1x1x8xf32>
    %89 = vector.shape_cast %88 : vector<1x1x8xf32> to vector<1x8xf32>
    %90 = vector.shape_cast %85 : vector<1x8xf32> to vector<1x1x8xf32>
    tpu.vector_store %arg4[%c0_74, %c2_75, %c0_76], %90 {strides = array<i32>} : memref<1x32x8xf32, #tpu.memory_space<vmem>>, vector<1x1x8xf32>,
    %91 = arith.subf %87, %85 : vector<1x8xf32>
    %c0_77 = arith.constant 0 : index
    %c2_78 = arith.constant 2 : index
    %c0_79 = arith.constant 0 : index
    %92 = vector.load %arg3[%c0_77, %c2_78, %c0_79] : memref<1x32x8xf32, #tpu.memory_space<vmem>>, vector<1x1x8xf32>
    %93 = vector.shape_cast %92 : vector<1x1x8xf32> to vector<1x8xf32>
    %94 = vector.shape_cast %91 : vector<1x8xf32> to vector<1x1x8xf32>
    tpu.vector_store %arg3[%c0_77, %c2_78, %c0_79], %94 {strides = array<i32>} : memref<1x32x8xf32, #tpu.memory_space<vmem>>, vector<1x1x8xf32>,
    %c0_80 = arith.constant 0 : index
    %c0_81 = arith.constant 0 : index
    %c0_82 = arith.constant 0 : index
    %95 = vector.load %arg2[%c0_80, %c0_81, %c0_82] : memref<1x32x8xf32, #tpu.memory_space<vmem>>, vector<1x16x8xf32>
    %96 = vector.shape_cast %95 : vector<1x16x8xf32> to vector<16x8xf32>
    %cst_83 = arith.constant dense<0.000000e+00> : vector<8xf32>
    %97 = vector.multi_reduction <add>, %96, %cst_83 [0] : vector<16x8xf32> to vector<8xf32>
    %98 = vector.shape_cast %97 : vector<8xf32> to vector<1x8xf32>
    %c0_84 = arith.constant 0 : index
    %c0_85 = arith.constant 0 : index
    %c0_86 = arith.constant 0 : index
    %99 = vector.load %arg2[%c0_84, %c0_85, %c0_86] : memref<1x32x8xf32, #tpu.memory_space<vmem>>, vector<1x1x8xf32>
    %100 = vector.shape_cast %99 : vector<1x1x8xf32> to vector<1x8xf32>
    %cst_87 = arith.constant 9.000000e+00 : f32
    %101 = vector.broadcast %cst_87 : f32 to vector<1x8xf32>
    %102 = arith.mulf %101, %100 : vector<1x8xf32>
    %103 = arith.addf %98, %102 : vector<1x8xf32>
    %cst_88 = arith.constant 4.000000e-02 : f32
    %104 = vector.broadcast %cst_88 : f32 to vector<1x8xf32>
    %105 = arith.mulf %103, %104 : vector<1x8xf32>
    %c0_89 = arith.constant 0 : index
    %c3_90 = arith.constant 3 : index
    %c0_91 = arith.constant 0 : index
    %106 = vector.load %arg2[%c0_89, %c3_90, %c0_91] : memref<1x32x8xf32, #tpu.memory_space<vmem>>, vector<1x1x8xf32>
    %107 = vector.shape_cast %106 : vector<1x1x8xf32> to vector<1x8xf32>
    %c0_92 = arith.constant 0 : index
    %c3_93 = arith.constant 3 : index
    %c0_94 = arith.constant 0 : index
    %108 = vector.load %arg4[%c0_92, %c3_93, %c0_94] : memref<1x32x8xf32, #tpu.memory_space<vmem>>, vector<1x1x8xf32>
    %109 = vector.shape_cast %108 : vector<1x1x8xf32> to vector<1x8xf32>
    %110 = vector.shape_cast %105 : vector<1x8xf32> to vector<1x1x8xf32>
    tpu.vector_store %arg4[%c0_92, %c3_93, %c0_94], %110 {strides = array<i32>} : memref<1x32x8xf32, #tpu.memory_space<vmem>>, vector<1x1x8xf32>,
    %111 = arith.subf %107, %105 : vector<1x8xf32>
    %c0_95 = arith.constant 0 : index
    %c3_96 = arith.constant 3 : index
    %c0_97 = arith.constant 0 : index
    %112 = vector.load %arg3[%c0_95, %c3_96, %c0_97] : memref<1x32x8xf32, #tpu.memory_space<vmem>>, vector<1x1x8xf32>
    %113 = vector.shape_cast %112 : vector<1x1x8xf32> to vector<1x8xf32>
    %114 = vector.shape_cast %111 : vector<1x8xf32> to vector<1x1x8xf32>
    tpu.vector_store %arg3[%c0_95, %c3_96, %c0_97], %114 {strides = array<i32>} : memref<1x32x8xf32, #tpu.memory_space<vmem>>, vector<1x1x8xf32>,
    %c0_98 = arith.constant 0 : index
    %c0_99 = arith.constant 0 : index
    %c0_100 = arith.constant 0 : index
    %115 = vector.load %arg2[%c0_98, %c0_99, %c0_100] : memref<1x32x8xf32, #tpu.memory_space<vmem>>, vector<1x17x8xf32>
    %116 = vector.shape_cast %115 : vector<1x17x8xf32> to vector<17x8xf32>
    %cst_101 = arith.constant dense<0.000000e+00> : vector<8xf32>
    %117 = vector.multi_reduction <add>, %116, %cst_101 [0] : vector<17x8xf32> to vector<8xf32>
    %118 = vector.shape_cast %117 : vector<8xf32> to vector<1x8xf32>
    %c0_102 = arith.constant 0 : index
    %c0_103 = arith.constant 0 : index
    %c0_104 = arith.constant 0 : index
    %119 = vector.load %arg2[%c0_102, %c0_103, %c0_104] : memref<1x32x8xf32, #tpu.memory_space<vmem>>, vector<1x1x8xf32>
    %120 = vector.shape_cast %119 : vector<1x1x8xf32> to vector<1x8xf32>
    %cst_105 = arith.constant 8.000000e+00 : f32
    %121 = vector.broadcast %cst_105 : f32 to vector<1x8xf32>
    %122 = arith.mulf %121, %120 : vector<1x8xf32>
    %123 = arith.addf %118, %122 : vector<1x8xf32>
    %cst_106 = arith.constant 4.000000e-02 : f32
    %124 = vector.broadcast %cst_106 : f32 to vector<1x8xf32>
    %125 = arith.mulf %123, %124 : vector<1x8xf32>
    %c0_107 = arith.constant 0 : index
    %c4_108 = arith.constant 4 : index
    %c0_109 = arith.constant 0 : index
    %126 = vector.load %arg2[%c0_107, %c4_108, %c0_109] : memref<1x32x8xf32, #tpu.memory_space<vmem>>, vector<1x1x8xf32>
    %127 = vector.shape_cast %126 : vector<1x1x8xf32> to vector<1x8xf32>
    %c0_110 = arith.constant 0 : index
    %c4_111 = arith.constant 4 : index
    %c0_112 = arith.constant 0 : index
    %128 = vector.load %arg4[%c0_110, %c4_111, %c0_112] : memref<1x32x8xf32, #tpu.memory_space<vmem>>, vector<1x1x8xf32>
    %129 = vector.shape_cast %128 : vector<1x1x8xf32> to vector<1x8xf32>
    %130 = vector.shape_cast %125 : vector<1x8xf32> to vector<1x1x8xf32>
    tpu.vector_store %arg4[%c0_110, %c4_111, %c0_112], %130 {strides = array<i32>} : memref<1x32x8xf32, #tpu.memory_space<vmem>>, vector<1x1x8xf32>,
    %131 = arith.subf %127, %125 : vector<1x8xf32>
    %c0_113 = arith.constant 0 : index
    %c4_114 = arith.constant 4 : index
    %c0_115 = arith.constant 0 : index
    %132 = vector.load %arg3[%c0_113, %c4_114, %c0_115] : memref<1x32x8xf32, #tpu.memory_space<vmem>>, vector<1x1x8xf32>
    %133 = vector.shape_cast %132 : vector<1x1x8xf32> to vector<1x8xf32>
    %134 = vector.shape_cast %131 : vector<1x8xf32> to vector<1x1x8xf32>
    tpu.vector_store %arg3[%c0_113, %c4_114, %c0_115], %134 {strides = array<i32>} : memref<1x32x8xf32, #tpu.memory_space<vmem>>, vector<1x1x8xf32>,
    %c0_116 = arith.constant 0 : index
    %c0_117 = arith.constant 0 : index
    %c0_118 = arith.constant 0 : index
    %135 = vector.load %arg2[%c0_116, %c0_117, %c0_118] : memref<1x32x8xf32, #tpu.memory_space<vmem>>, vector<1x18x8xf32>
    %136 = vector.shape_cast %135 : vector<1x18x8xf32> to vector<18x8xf32>
    %cst_119 = arith.constant dense<0.000000e+00> : vector<8xf32>
    %137 = vector.multi_reduction <add>, %136, %cst_119 [0] : vector<18x8xf32> to vector<8xf32>
    %138 = vector.shape_cast %137 : vector<8xf32> to vector<1x8xf32>
    %c0_120 = arith.constant 0 : index
    %c0_121 = arith.constant 0 : index
    %c0_122 = arith.constant 0 : index
    %139 = vector.load %arg2[%c0_120, %c0_121, %c0_122] : memref<1x32x8xf32, #tpu.memory_space<vmem>>, vector<1x1x8xf32>
    %140 = vector.shape_cast %139 : vector<1x1x8xf32> to vector<1x8xf32>
    %cst_123 = arith.constant 7.000000e+00 : f32
    %141 = vector.broadcast %cst_123 : f32 to vector<1x8xf32>
    %142 = arith.mulf %141, %140 : vector<1x8xf32>
    %143 = arith.addf %138, %142 : vector<1x8xf32>
    %cst_124 = arith.constant 4.000000e-02 : f32
    %144 = vector.broadcast %cst_124 : f32 to vector<1x8xf32>
    %145 = arith.mulf %143, %144 : vector<1x8xf32>
    %c0_125 = arith.constant 0 : index
    %c5 = arith.constant 5 : index
    %c0_126 = arith.constant 0 : index
    %146 = vector.load %arg2[%c0_125, %c5, %c0_126] : memref<1x32x8xf32, #tpu.memory_space<vmem>>, vector<1x1x8xf32>
    %147 = vector.shape_cast %146 : vector<1x1x8xf32> to vector<1x8xf32>
    %c0_127 = arith.constant 0 : index
    %c5_128 = arith.constant 5 : index
    %c0_129 = arith.constant 0 : index
    %148 = vector.load %arg4[%c0_127, %c5_128, %c0_129] : memref<1x32x8xf32, #tpu.memory_space<vmem>>, vector<1x1x8xf32>
    %149 = vector.shape_cast %148 : vector<1x1x8xf32> to vector<1x8xf32>
    %150 = vector.shape_cast %145 : vector<1x8xf32> to vector<1x1x8xf32>
    tpu.vector_store %arg4[%c0_127, %c5_128, %c0_129], %150 {strides = array<i32>} : memref<1x32x8xf32, #tpu.memory_space<vmem>>, vector<1x1x8xf32>,
    %151 = arith.subf %147, %145 : vector<1x8xf32>
    %c0_130 = arith.constant 0 : index
    %c5_131 = arith.constant 5 : index
    %c0_132 = arith.constant 0 : index
    %152 = vector.load %arg3[%c0_130, %c5_131, %c0_132] : memref<1x32x8xf32, #tpu.memory_space<vmem>>, vector<1x1x8xf32>
    %153 = vector.shape_cast %152 : vector<1x1x8xf32> to vector<1x8xf32>
    %154 = vector.shape_cast %151 : vector<1x8xf32> to vector<1x1x8xf32>
    tpu.vector_store %arg3[%c0_130, %c5_131, %c0_132], %154 {strides = array<i32>} : memref<1x32x8xf32, #tpu.memory_space<vmem>>, vector<1x1x8xf32>,
    %c0_133 = arith.constant 0 : index
    %c0_134 = arith.constant 0 : index
    %c0_135 = arith.constant 0 : index
    %155 = vector.load %arg2[%c0_133, %c0_134, %c0_135] : memref<1x32x8xf32, #tpu.memory_space<vmem>>, vector<1x19x8xf32>
    %156 = vector.shape_cast %155 : vector<1x19x8xf32> to vector<19x8xf32>
    %cst_136 = arith.constant dense<0.000000e+00> : vector<8xf32>
    %157 = vector.multi_reduction <add>, %156, %cst_136 [0] : vector<19x8xf32> to vector<8xf32>
    %158 = vector.shape_cast %157 : vector<8xf32> to vector<1x8xf32>
    %c0_137 = arith.constant 0 : index
    %c0_138 = arith.constant 0 : index
    %c0_139 = arith.constant 0 : index
    %159 = vector.load %arg2[%c0_137, %c0_138, %c0_139] : memref<1x32x8xf32, #tpu.memory_space<vmem>>, vector<1x1x8xf32>
    %160 = vector.shape_cast %159 : vector<1x1x8xf32> to vector<1x8xf32>
    %cst_140 = arith.constant 6.000000e+00 : f32
    %161 = vector.broadcast %cst_140 : f32 to vector<1x8xf32>
    %162 = arith.mulf %161, %160 : vector<1x8xf32>
    %163 = arith.addf %158, %162 : vector<1x8xf32>
    %cst_141 = arith.constant 4.000000e-02 : f32
    %164 = vector.broadcast %cst_141 : f32 to vector<1x8xf32>
    %165 = arith.mulf %163, %164 : vector<1x8xf32>
    %c0_142 = arith.constant 0 : index
    %c6 = arith.constant 6 : index
    %c0_143 = arith.constant 0 : index
    %166 = vector.load %arg2[%c0_142, %c6, %c0_143] : memref<1x32x8xf32, #tpu.memory_space<vmem>>, vector<1x1x8xf32>
    %167 = vector.shape_cast %166 : vector<1x1x8xf32> to vector<1x8xf32>
    %c0_144 = arith.constant 0 : index
    %c6_145 = arith.constant 6 : index
    %c0_146 = arith.constant 0 : index
    %168 = vector.load %arg4[%c0_144, %c6_145, %c0_146] : memref<1x32x8xf32, #tpu.memory_space<vmem>>, vector<1x1x8xf32>
    %169 = vector.shape_cast %168 : vector<1x1x8xf32> to vector<1x8xf32>
    %170 = vector.shape_cast %165 : vector<1x8xf32> to vector<1x1x8xf32>
    tpu.vector_store %arg4[%c0_144, %c6_145, %c0_146], %170 {strides = array<i32>} : memref<1x32x8xf32, #tpu.memory_space<vmem>>, vector<1x1x8xf32>,
    %171 = arith.subf %167, %165 : vector<1x8xf32>
    %c0_147 = arith.constant 0 : index
    %c6_148 = arith.constant 6 : index
    %c0_149 = arith.constant 0 : index
    %172 = vector.load %arg3[%c0_147, %c6_148, %c0_149] : memref<1x32x8xf32, #tpu.memory_space<vmem>>, vector<1x1x8xf32>
    %173 = vector.shape_cast %172 : vector<1x1x8xf32> to vector<1x8xf32>
    %174 = vector.shape_cast %171 : vector<1x8xf32> to vector<1x1x8xf32>
    tpu.vector_store %arg3[%c0_147, %c6_148, %c0_149], %174 {strides = array<i32>} : memref<1x32x8xf32, #tpu.memory_space<vmem>>, vector<1x1x8xf32>,
    %c0_150 = arith.constant 0 : index
    %c0_151 = arith.constant 0 : index
    %c0_152 = arith.constant 0 : index
    %175 = vector.load %arg2[%c0_150, %c0_151, %c0_152] : memref<1x32x8xf32, #tpu.memory_space<vmem>>, vector<1x20x8xf32>
    %176 = vector.shape_cast %175 : vector<1x20x8xf32> to vector<20x8xf32>
    %cst_153 = arith.constant dense<0.000000e+00> : vector<8xf32>
    %177 = vector.multi_reduction <add>, %176, %cst_153 [0] : vector<20x8xf32> to vector<8xf32>
    %178 = vector.shape_cast %177 : vector<8xf32> to vector<1x8xf32>
    %c0_154 = arith.constant 0 : index
    %c0_155 = arith.constant 0 : index
    %c0_156 = arith.constant 0 : index
    %179 = vector.load %arg2[%c0_154, %c0_155, %c0_156] : memref<1x32x8xf32, #tpu.memory_space<vmem>>, vector<1x1x8xf32>
    %180 = vector.shape_cast %179 : vector<1x1x8xf32> to vector<1x8xf32>
    %cst_157 = arith.constant 5.000000e+00 : f32
    %181 = vector.broadcast %cst_157 : f32 to vector<1x8xf32>
    %182 = arith.mulf %181, %180 : vector<1x8xf32>
    %183 = arith.addf %178, %182 : vector<1x8xf32>
    %cst_158 = arith.constant 4.000000e-02 : f32
    %184 = vector.broadcast %cst_158 : f32 to vector<1x8xf32>
    %185 = arith.mulf %183, %184 : vector<1x8xf32>
    %c0_159 = arith.constant 0 : index
    %c7 = arith.constant 7 : index
    %c0_160 = arith.constant 0 : index
    %186 = vector.load %arg2[%c0_159, %c7, %c0_160] : memref<1x32x8xf32, #tpu.memory_space<vmem>>, vector<1x1x8xf32>
    %187 = vector.shape_cast %186 : vector<1x1x8xf32> to vector<1x8xf32>
    %c0_161 = arith.constant 0 : index
    %c7_162 = arith.constant 7 : index
    %c0_163 = arith.constant 0 : index
    %188 = vector.load %arg4[%c0_161, %c7_162, %c0_163] : memref<1x32x8xf32, #tpu.memory_space<vmem>>, vector<1x1x8xf32>
    %189 = vector.shape_cast %188 : vector<1x1x8xf32> to vector<1x8xf32>
    %190 = vector.shape_cast %185 : vector<1x8xf32> to vector<1x1x8xf32>
    tpu.vector_store %arg4[%c0_161, %c7_162, %c0_163], %190 {strides = array<i32>} : memref<1x32x8xf32, #tpu.memory_space<vmem>>, vector<1x1x8xf32>,
    %191 = arith.subf %187, %185 : vector<1x8xf32>
    %c0_164 = arith.constant 0 : index
    %c7_165 = arith.constant 7 : index
    %c0_166 = arith.constant 0 : index
    %192 = vector.load %arg3[%c0_164, %c7_165, %c0_166] : memref<1x32x8xf32, #tpu.memory_space<vmem>>, vector<1x1x8xf32>
    %193 = vector.shape_cast %192 : vector<1x1x8xf32> to vector<1x8xf32>
    %194 = vector.shape_cast %191 : vector<1x8xf32> to vector<1x1x8xf32>
    tpu.vector_store %arg3[%c0_164, %c7_165, %c0_166], %194 {strides = array<i32>} : memref<1x32x8xf32, #tpu.memory_space<vmem>>, vector<1x1x8xf32>,
    %c0_167 = arith.constant 0 : index
    %c0_168 = arith.constant 0 : index
    %c0_169 = arith.constant 0 : index
    %195 = vector.load %arg2[%c0_167, %c0_168, %c0_169] : memref<1x32x8xf32, #tpu.memory_space<vmem>>, vector<1x21x8xf32>
    %196 = vector.shape_cast %195 : vector<1x21x8xf32> to vector<21x8xf32>
    %cst_170 = arith.constant dense<0.000000e+00> : vector<8xf32>
    %197 = vector.multi_reduction <add>, %196, %cst_170 [0] : vector<21x8xf32> to vector<8xf32>
    %198 = vector.shape_cast %197 : vector<8xf32> to vector<1x8xf32>
    %c0_171 = arith.constant 0 : index
    %c0_172 = arith.constant 0 : index
    %c0_173 = arith.constant 0 : index
    %199 = vector.load %arg2[%c0_171, %c0_172, %c0_173] : memref<1x32x8xf32, #tpu.memory_space<vmem>>, vector<1x1x8xf32>
    %200 = vector.shape_cast %199 : vector<1x1x8xf32> to vector<1x8xf32>
    %cst_174 = arith.constant 4.000000e+00 : f32
    %201 = vector.broadcast %cst_174 : f32 to vector<1x8xf32>
    %202 = arith.mulf %201, %200 : vector<1x8xf32>
    %203 = arith.addf %198, %202 : vector<1x8xf32>
    %cst_175 = arith.constant 4.000000e-02 : f32
    %204 = vector.broadcast %cst_175 : f32 to vector<1x8xf32>
    %205 = arith.mulf %203, %204 : vector<1x8xf32>
    %c0_176 = arith.constant 0 : index
    %c8 = arith.constant 8 : index
    %c0_177 = arith.constant 0 : index
    %206 = vector.load %arg2[%c0_176, %c8, %c0_177] : memref<1x32x8xf32, #tpu.memory_space<vmem>>, vector<1x1x8xf32>
    %207 = vector.shape_cast %206 : vector<1x1x8xf32> to vector<1x8xf32>
    %c0_178 = arith.constant 0 : index
    %c8_179 = arith.constant 8 : index
    %c0_180 = arith.constant 0 : index
    %208 = vector.load %arg4[%c0_178, %c8_179, %c0_180] : memref<1x32x8xf32, #tpu.memory_space<vmem>>, vector<1x1x8xf32>
    %209 = vector.shape_cast %208 : vector<1x1x8xf32> to vector<1x8xf32>
    %210 = vector.shape_cast %205 : vector<1x8xf32> to vector<1x1x8xf32>
    tpu.vector_store %arg4[%c0_178, %c8_179, %c0_180], %210 {strides = array<i32>} : memref<1x32x8xf32, #tpu.memory_space<vmem>>, vector<1x1x8xf32>,
    %211 = arith.subf %207, %205 : vector<1x8xf32>
    %c0_181 = arith.constant 0 : index
    %c8_182 = arith.constant 8 : index
    %c0_183 = arith.constant 0 : index
    %212 = vector.load %arg3[%c0_181, %c8_182, %c0_183] : memref<1x32x8xf32, #tpu.memory_space<vmem>>, vector<1x1x8xf32>
    %213 = vector.shape_cast %212 : vector<1x1x8xf32> to vector<1x8xf32>
    %214 = vector.shape_cast %211 : vector<1x8xf32> to vector<1x1x8xf32>
    tpu.vector_store %arg3[%c0_181, %c8_182, %c0_183], %214 {strides = array<i32>} : memref<1x32x8xf32, #tpu.memory_space<vmem>>, vector<1x1x8xf32>,
    %c0_184 = arith.constant 0 : index
    %c0_185 = arith.constant 0 : index
    %c0_186 = arith.constant 0 : index
    %215 = vector.load %arg2[%c0_184, %c0_185, %c0_186] : memref<1x32x8xf32, #tpu.memory_space<vmem>>, vector<1x22x8xf32>
    %216 = vector.shape_cast %215 : vector<1x22x8xf32> to vector<22x8xf32>
    %cst_187 = arith.constant dense<0.000000e+00> : vector<8xf32>
    %217 = vector.multi_reduction <add>, %216, %cst_187 [0] : vector<22x8xf32> to vector<8xf32>
    %218 = vector.shape_cast %217 : vector<8xf32> to vector<1x8xf32>
    %c0_188 = arith.constant 0 : index
    %c0_189 = arith.constant 0 : index
    %c0_190 = arith.constant 0 : index
    %219 = vector.load %arg2[%c0_188, %c0_189, %c0_190] : memref<1x32x8xf32, #tpu.memory_space<vmem>>, vector<1x1x8xf32>
    %220 = vector.shape_cast %219 : vector<1x1x8xf32> to vector<1x8xf32>
    %cst_191 = arith.constant 3.000000e+00 : f32
    %221 = vector.broadcast %cst_191 : f32 to vector<1x8xf32>
    %222 = arith.mulf %221, %220 : vector<1x8xf32>
    %223 = arith.addf %218, %222 : vector<1x8xf32>
    %cst_192 = arith.constant 4.000000e-02 : f32
    %224 = vector.broadcast %cst_192 : f32 to vector<1x8xf32>
    %225 = arith.mulf %223, %224 : vector<1x8xf32>
    %c0_193 = arith.constant 0 : index
    %c9_194 = arith.constant 9 : index
    %c0_195 = arith.constant 0 : index
    %226 = vector.load %arg2[%c0_193, %c9_194, %c0_195] : memref<1x32x8xf32, #tpu.memory_space<vmem>>, vector<1x1x8xf32>
    %227 = vector.shape_cast %226 : vector<1x1x8xf32> to vector<1x8xf32>
    %c0_196 = arith.constant 0 : index
    %c9_197 = arith.constant 9 : index
    %c0_198 = arith.constant 0 : index
    %228 = vector.load %arg4[%c0_196, %c9_197, %c0_198] : memref<1x32x8xf32, #tpu.memory_space<vmem>>, vector<1x1x8xf32>
    %229 = vector.shape_cast %228 : vector<1x1x8xf32> to vector<1x8xf32>
    %230 = vector.shape_cast %225 : vector<1x8xf32> to vector<1x1x8xf32>
    tpu.vector_store %arg4[%c0_196, %c9_197, %c0_198], %230 {strides = array<i32>} : memref<1x32x8xf32, #tpu.memory_space<vmem>>, vector<1x1x8xf32>,
    %231 = arith.subf %227, %225 : vector<1x8xf32>
    %c0_199 = arith.constant 0 : index
    %c9_200 = arith.constant 9 : index
    %c0_201 = arith.constant 0 : index
    %232 = vector.load %arg3[%c0_199, %c9_200, %c0_201] : memref<1x32x8xf32, #tpu.memory_space<vmem>>, vector<1x1x8xf32>
    %233 = vector.shape_cast %232 : vector<1x1x8xf32> to vector<1x8xf32>
    %234 = vector.shape_cast %231 : vector<1x8xf32> to vector<1x1x8xf32>
    tpu.vector_store %arg3[%c0_199, %c9_200, %c0_201], %234 {strides = array<i32>} : memref<1x32x8xf32, #tpu.memory_space<vmem>>, vector<1x1x8xf32>,
    %c0_202 = arith.constant 0 : index
    %c0_203 = arith.constant 0 : index
    %c0_204 = arith.constant 0 : index
    %235 = vector.load %arg2[%c0_202, %c0_203, %c0_204] : memref<1x32x8xf32, #tpu.memory_space<vmem>>, vector<1x23x8xf32>
    %236 = vector.shape_cast %235 : vector<1x23x8xf32> to vector<23x8xf32>
    %cst_205 = arith.constant dense<0.000000e+00> : vector<8xf32>
    %237 = vector.multi_reduction <add>, %236, %cst_205 [0] : vector<23x8xf32> to vector<8xf32>
    %238 = vector.shape_cast %237 : vector<8xf32> to vector<1x8xf32>
    %c0_206 = arith.constant 0 : index
    %c0_207 = arith.constant 0 : index
    %c0_208 = arith.constant 0 : index
    %239 = vector.load %arg2[%c0_206, %c0_207, %c0_208] : memref<1x32x8xf32, #tpu.memory_space<vmem>>, vector<1x1x8xf32>
    %240 = vector.shape_cast %239 : vector<1x1x8xf32> to vector<1x8xf32>
    %cst_209 = arith.constant 2.000000e+00 : f32
    %241 = vector.broadcast %cst_209 : f32 to vector<1x8xf32>
    %242 = arith.mulf %241, %240 : vector<1x8xf32>
    %243 = arith.addf %238, %242 : vector<1x8xf32>
    %cst_210 = arith.constant 4.000000e-02 : f32
    %244 = vector.broadcast %cst_210 : f32 to vector<1x8xf32>
    %245 = arith.mulf %243, %244 : vector<1x8xf32>
    %c0_211 = arith.constant 0 : index
    %c10 = arith.constant 10 : index
    %c0_212 = arith.constant 0 : index
    %246 = vector.load %arg2[%c0_211, %c10, %c0_212] : memref<1x32x8xf32, #tpu.memory_space<vmem>>, vector<1x1x8xf32>
    %247 = vector.shape_cast %246 : vector<1x1x8xf32> to vector<1x8xf32>
    %c0_213 = arith.constant 0 : index
    %c10_214 = arith.constant 10 : index
    %c0_215 = arith.constant 0 : index
    %248 = vector.load %arg4[%c0_213, %c10_214, %c0_215] : memref<1x32x8xf32, #tpu.memory_space<vmem>>, vector<1x1x8xf32>
    %249 = vector.shape_cast %248 : vector<1x1x8xf32> to vector<1x8xf32>
    %250 = vector.shape_cast %245 : vector<1x8xf32> to vector<1x1x8xf32>
    tpu.vector_store %arg4[%c0_213, %c10_214, %c0_215], %250 {strides = array<i32>} : memref<1x32x8xf32, #tpu.memory_space<vmem>>, vector<1x1x8xf32>,
    %251 = arith.subf %247, %245 : vector<1x8xf32>
    %c0_216 = arith.constant 0 : index
    %c10_217 = arith.constant 10 : index
    %c0_218 = arith.constant 0 : index
    %252 = vector.load %arg3[%c0_216, %c10_217, %c0_218] : memref<1x32x8xf32, #tpu.memory_space<vmem>>, vector<1x1x8xf32>
    %253 = vector.shape_cast %252 : vector<1x1x8xf32> to vector<1x8xf32>
    %254 = vector.shape_cast %251 : vector<1x8xf32> to vector<1x1x8xf32>
    tpu.vector_store %arg3[%c0_216, %c10_217, %c0_218], %254 {strides = array<i32>} : memref<1x32x8xf32, #tpu.memory_space<vmem>>, vector<1x1x8xf32>,
    %c0_219 = arith.constant 0 : index
    %c0_220 = arith.constant 0 : index
    %c0_221 = arith.constant 0 : index
    %255 = vector.load %arg2[%c0_219, %c0_220, %c0_221] : memref<1x32x8xf32, #tpu.memory_space<vmem>>, vector<1x24x8xf32>
    %256 = vector.shape_cast %255 : vector<1x24x8xf32> to vector<24x8xf32>
    %cst_222 = arith.constant dense<0.000000e+00> : vector<8xf32>
    %257 = vector.multi_reduction <add>, %256, %cst_222 [0] : vector<24x8xf32> to vector<8xf32>
    %258 = vector.shape_cast %257 : vector<8xf32> to vector<1x8xf32>
    %c0_223 = arith.constant 0 : index
    %c0_224 = arith.constant 0 : index
    %c0_225 = arith.constant 0 : index
    %259 = vector.load %arg2[%c0_223, %c0_224, %c0_225] : memref<1x32x8xf32, #tpu.memory_space<vmem>>, vector<1x1x8xf32>
    %260 = vector.shape_cast %259 : vector<1x1x8xf32> to vector<1x8xf32>
    %cst_226 = arith.constant 1.000000e+00 : f32
    %261 = vector.broadcast %cst_226 : f32 to vector<1x8xf32>
    %262 = arith.mulf %261, %260 : vector<1x8xf32>
    %263 = arith.addf %258, %262 : vector<1x8xf32>
    %cst_227 = arith.constant 4.000000e-02 : f32
    %264 = vector.broadcast %cst_227 : f32 to vector<1x8xf32>
    %265 = arith.mulf %263, %264 : vector<1x8xf32>
    %c0_228 = arith.constant 0 : index
    %c11 = arith.constant 11 : index
    %c0_229 = arith.constant 0 : index
    %266 = vector.load %arg2[%c0_228, %c11, %c0_229] : memref<1x32x8xf32, #tpu.memory_space<vmem>>, vector<1x1x8xf32>
    %267 = vector.shape_cast %266 : vector<1x1x8xf32> to vector<1x8xf32>
    %c0_230 = arith.constant 0 : index
    %c11_231 = arith.constant 11 : index
    %c0_232 = arith.constant 0 : index
    %268 = vector.load %arg4[%c0_230, %c11_231, %c0_232] : memref<1x32x8xf32, #tpu.memory_space<vmem>>, vector<1x1x8xf32>
    %269 = vector.shape_cast %268 : vector<1x1x8xf32> to vector<1x8xf32>
    %270 = vector.shape_cast %265 : vector<1x8xf32> to vector<1x1x8xf32>
    tpu.vector_store %arg4[%c0_230, %c11_231, %c0_232], %270 {strides = array<i32>} : memref<1x32x8xf32, #tpu.memory_space<vmem>>, vector<1x1x8xf32>,
    %271 = arith.subf %267, %265 : vector<1x8xf32>
    %c0_233 = arith.constant 0 : index
    %c11_234 = arith.constant 11 : index
    %c0_235 = arith.constant 0 : index
    %272 = vector.load %arg3[%c0_233, %c11_234, %c0_235] : memref<1x32x8xf32, #tpu.memory_space<vmem>>, vector<1x1x8xf32>
    %273 = vector.shape_cast %272 : vector<1x1x8xf32> to vector<1x8xf32>
    %274 = vector.shape_cast %271 : vector<1x8xf32> to vector<1x1x8xf32>
    tpu.vector_store %arg3[%c0_233, %c11_234, %c0_235], %274 {strides = array<i32>} : memref<1x32x8xf32, #tpu.memory_space<vmem>>, vector<1x1x8xf32>,
    %c0_236 = arith.constant 0 : index
    %c0_237 = arith.constant 0 : index
    %c0_238 = arith.constant 0 : index
    %275 = vector.load %arg2[%c0_236, %c0_237, %c0_238] : memref<1x32x8xf32, #tpu.memory_space<vmem>>, vector<1x25x8xf32>
    %276 = vector.shape_cast %275 : vector<1x25x8xf32> to vector<25x8xf32>
    %cst_239 = arith.constant dense<0.000000e+00> : vector<8xf32>
    %277 = vector.multi_reduction <add>, %276, %cst_239 [0] : vector<25x8xf32> to vector<8xf32>
    %278 = vector.shape_cast %277 : vector<8xf32> to vector<1x8xf32>
    %cst_240 = arith.constant 4.000000e-02 : f32
    %279 = vector.broadcast %cst_240 : f32 to vector<1x8xf32>
    %280 = arith.mulf %278, %279 : vector<1x8xf32>
    %c0_241 = arith.constant 0 : index
    %c12 = arith.constant 12 : index
    %c0_242 = arith.constant 0 : index
    %281 = vector.load %arg2[%c0_241, %c12, %c0_242] : memref<1x32x8xf32, #tpu.memory_space<vmem>>, vector<1x1x8xf32>
    %282 = vector.shape_cast %281 : vector<1x1x8xf32> to vector<1x8xf32>
    %c0_243 = arith.constant 0 : index
    %c12_244 = arith.constant 12 : index
    %c0_245 = arith.constant 0 : index
    %283 = vector.load %arg4[%c0_243, %c12_244, %c0_245] : memref<1x32x8xf32, #tpu.memory_space<vmem>>, vector<1x1x8xf32>
    %284 = vector.shape_cast %283 : vector<1x1x8xf32> to vector<1x8xf32>
    %285 = vector.shape_cast %280 : vector<1x8xf32> to vector<1x1x8xf32>
    tpu.vector_store %arg4[%c0_243, %c12_244, %c0_245], %285 {strides = array<i32>} : memref<1x32x8xf32, #tpu.memory_space<vmem>>, vector<1x1x8xf32>,
    %286 = arith.subf %282, %280 : vector<1x8xf32>
    %c0_246 = arith.constant 0 : index
    %c12_247 = arith.constant 12 : index
    %c0_248 = arith.constant 0 : index
    %287 = vector.load %arg3[%c0_246, %c12_247, %c0_248] : memref<1x32x8xf32, #tpu.memory_space<vmem>>, vector<1x1x8xf32>
    %288 = vector.shape_cast %287 : vector<1x1x8xf32> to vector<1x8xf32>
    %289 = vector.shape_cast %286 : vector<1x8xf32> to vector<1x1x8xf32>
    tpu.vector_store %arg3[%c0_246, %c12_247, %c0_248], %289 {strides = array<i32>} : memref<1x32x8xf32, #tpu.memory_space<vmem>>, vector<1x1x8xf32>,
    %c0_249 = arith.constant 0 : index
    %c1_250 = arith.constant 1 : index
    %c0_251 = arith.constant 0 : index
    %290 = vector.load %arg2[%c0_249, %c1_250, %c0_251] : memref<1x32x8xf32, #tpu.memory_space<vmem>>, vector<1x25x8xf32>
    %291 = vector.shape_cast %290 : vector<1x25x8xf32> to vector<25x8xf32>
    %cst_252 = arith.constant dense<0.000000e+00> : vector<8xf32>
    %292 = vector.multi_reduction <add>, %291, %cst_252 [0] : vector<25x8xf32> to vector<8xf32>
    %293 = vector.shape_cast %292 : vector<8xf32> to vector<1x8xf32>
    %cst_253 = arith.constant 4.000000e-02 : f32
    %294 = vector.broadcast %cst_253 : f32 to vector<1x8xf32>
    %295 = arith.mulf %293, %294 : vector<1x8xf32>
    %c0_254 = arith.constant 0 : index
    %c13 = arith.constant 13 : index
    %c0_255 = arith.constant 0 : index
    %296 = vector.load %arg2[%c0_254, %c13, %c0_255] : memref<1x32x8xf32, #tpu.memory_space<vmem>>, vector<1x1x8xf32>
    %297 = vector.shape_cast %296 : vector<1x1x8xf32> to vector<1x8xf32>
    %c0_256 = arith.constant 0 : index
    %c13_257 = arith.constant 13 : index
    %c0_258 = arith.constant 0 : index
    %298 = vector.load %arg4[%c0_256, %c13_257, %c0_258] : memref<1x32x8xf32, #tpu.memory_space<vmem>>, vector<1x1x8xf32>
    %299 = vector.shape_cast %298 : vector<1x1x8xf32> to vector<1x8xf32>
    %300 = vector.shape_cast %295 : vector<1x8xf32> to vector<1x1x8xf32>
    tpu.vector_store %arg4[%c0_256, %c13_257, %c0_258], %300 {strides = array<i32>} : memref<1x32x8xf32, #tpu.memory_space<vmem>>, vector<1x1x8xf32>,
    %301 = arith.subf %297, %295 : vector<1x8xf32>
    %c0_259 = arith.constant 0 : index
    %c13_260 = arith.constant 13 : index
    %c0_261 = arith.constant 0 : index
    %302 = vector.load %arg3[%c0_259, %c13_260, %c0_261] : memref<1x32x8xf32, #tpu.memory_space<vmem>>, vector<1x1x8xf32>
    %303 = vector.shape_cast %302 : vector<1x1x8xf32> to vector<1x8xf32>
    %304 = vector.shape_cast %301 : vector<1x8xf32> to vector<1x1x8xf32>
    tpu.vector_store %arg3[%c0_259, %c13_260, %c0_261], %304 {strides = array<i32>} : memref<1x32x8xf32, #tpu.memory_space<vmem>>, vector<1x1x8xf32>,
    %c0_262 = arith.constant 0 : index
    %c2_263 = arith.constant 2 : index
    %c0_264 = arith.constant 0 : index
    %305 = vector.load %arg2[%c0_262, %c2_263, %c0_264] : memref<1x32x8xf32, #tpu.memory_space<vmem>>, vector<1x25x8xf32>
    %306 = vector.shape_cast %305 : vector<1x25x8xf32> to vector<25x8xf32>
    %cst_265 = arith.constant dense<0.000000e+00> : vector<8xf32>
    %307 = vector.multi_reduction <add>, %306, %cst_265 [0] : vector<25x8xf32> to vector<8xf32>
    %308 = vector.shape_cast %307 : vector<8xf32> to vector<1x8xf32>
    %cst_266 = arith.constant 4.000000e-02 : f32
    %309 = vector.broadcast %cst_266 : f32 to vector<1x8xf32>
    %310 = arith.mulf %308, %309 : vector<1x8xf32>
    %c0_267 = arith.constant 0 : index
    %c14_268 = arith.constant 14 : index
    %c0_269 = arith.constant 0 : index
    %311 = vector.load %arg2[%c0_267, %c14_268, %c0_269] : memref<1x32x8xf32, #tpu.memory_space<vmem>>, vector<1x1x8xf32>
    %312 = vector.shape_cast %311 : vector<1x1x8xf32> to vector<1x8xf32>
    %c0_270 = arith.constant 0 : index
    %c14_271 = arith.constant 14 : index
    %c0_272 = arith.constant 0 : index
    %313 = vector.load %arg4[%c0_270, %c14_271, %c0_272] : memref<1x32x8xf32, #tpu.memory_space<vmem>>, vector<1x1x8xf32>
    %314 = vector.shape_cast %313 : vector<1x1x8xf32> to vector<1x8xf32>
    %315 = vector.shape_cast %310 : vector<1x8xf32> to vector<1x1x8xf32>
    tpu.vector_store %arg4[%c0_270, %c14_271, %c0_272], %315 {strides = array<i32>} : memref<1x32x8xf32, #tpu.memory_space<vmem>>, vector<1x1x8xf32>,
    %316 = arith.subf %312, %310 : vector<1x8xf32>
    %c0_273 = arith.constant 0 : index
    %c14_274 = arith.constant 14 : index
    %c0_275 = arith.constant 0 : index
    %317 = vector.load %arg3[%c0_273, %c14_274, %c0_275] : memref<1x32x8xf32, #tpu.memory_space<vmem>>, vector<1x1x8xf32>
    %318 = vector.shape_cast %317 : vector<1x1x8xf32> to vector<1x8xf32>
    %319 = vector.shape_cast %316 : vector<1x8xf32> to vector<1x1x8xf32>
    tpu.vector_store %arg3[%c0_273, %c14_274, %c0_275], %319 {strides = array<i32>} : memref<1x32x8xf32, #tpu.memory_space<vmem>>, vector<1x1x8xf32>,
    %c0_276 = arith.constant 0 : index
    %c3_277 = arith.constant 3 : index
    %c0_278 = arith.constant 0 : index
    %320 = vector.load %arg2[%c0_276, %c3_277, %c0_278] : memref<1x32x8xf32, #tpu.memory_space<vmem>>, vector<1x25x8xf32>
    %321 = vector.shape_cast %320 : vector<1x25x8xf32> to vector<25x8xf32>
    %cst_279 = arith.constant dense<0.000000e+00> : vector<8xf32>
    %322 = vector.multi_reduction <add>, %321, %cst_279 [0] : vector<25x8xf32> to vector<8xf32>
    %323 = vector.shape_cast %322 : vector<8xf32> to vector<1x8xf32>
    %cst_280 = arith.constant 4.000000e-02 : f32
    %324 = vector.broadcast %cst_280 : f32 to vector<1x8xf32>
    %325 = arith.mulf %323, %324 : vector<1x8xf32>
    %c0_281 = arith.constant 0 : index
    %c15 = arith.constant 15 : index
    %c0_282 = arith.constant 0 : index
    %326 = vector.load %arg2[%c0_281, %c15, %c0_282] : memref<1x32x8xf32, #tpu.memory_space<vmem>>, vector<1x1x8xf32>
    %327 = vector.shape_cast %326 : vector<1x1x8xf32> to vector<1x8xf32>
    %c0_283 = arith.constant 0 : index
    %c15_284 = arith.constant 15 : index
    %c0_285 = arith.constant 0 : index
    %328 = vector.load %arg4[%c0_283, %c15_284, %c0_285] : memref<1x32x8xf32, #tpu.memory_space<vmem>>, vector<1x1x8xf32>
    %329 = vector.shape_cast %328 : vector<1x1x8xf32> to vector<1x8xf32>
    %330 = vector.shape_cast %325 : vector<1x8xf32> to vector<1x1x8xf32>
    tpu.vector_store %arg4[%c0_283, %c15_284, %c0_285], %330 {strides = array<i32>} : memref<1x32x8xf32, #tpu.memory_space<vmem>>, vector<1x1x8xf32>,
    %331 = arith.subf %327, %325 : vector<1x8xf32>
    %c0_286 = arith.constant 0 : index
    %c15_287 = arith.constant 15 : index
    %c0_288 = arith.constant 0 : index
    %332 = vector.load %arg3[%c0_286, %c15_287, %c0_288] : memref<1x32x8xf32, #tpu.memory_space<vmem>>, vector<1x1x8xf32>
    %333 = vector.shape_cast %332 : vector<1x1x8xf32> to vector<1x8xf32>
    %334 = vector.shape_cast %331 : vector<1x8xf32> to vector<1x1x8xf32>
    tpu.vector_store %arg3[%c0_286, %c15_287, %c0_288], %334 {strides = array<i32>} : memref<1x32x8xf32, #tpu.memory_space<vmem>>, vector<1x1x8xf32>,
    %c0_289 = arith.constant 0 : index
    %c8_290 = arith.constant 8 : index
    %c0_291 = arith.constant 0 : index
    %335 = vector.load %arg2[%c0_289, %c8_290, %c0_291] : memref<1x32x8xf32, #tpu.memory_space<vmem>>, vector<1x24x8xf32>
    %336 = vector.shape_cast %335 : vector<1x24x8xf32> to vector<24x8xf32>
    %cst_292 = arith.constant dense<0.000000e+00> : vector<8xf32>
    %337 = vector.multi_reduction <add>, %336, %cst_292 [0] : vector<24x8xf32> to vector<8xf32>
    %338 = vector.shape_cast %337 : vector<8xf32> to vector<1x8xf32>
    %c0_293 = arith.constant 0 : index
    %c31 = arith.constant 31 : index
    %c0_294 = arith.constant 0 : index
    %339 = vector.load %arg2[%c0_293, %c31, %c0_294] : memref<1x32x8xf32, #tpu.memory_space<vmem>>, vector<1x1x8xf32>
    %340 = vector.shape_cast %339 : vector<1x1x8xf32> to vector<1x8xf32>
    %cst_295 = arith.constant 1.000000e+00 : f32
    %341 = vector.broadcast %cst_295 : f32 to vector<1x8xf32>
    %342 = arith.mulf %341, %340 : vector<1x8xf32>
    %343 = arith.addf %338, %342 : vector<1x8xf32>
    %cst_296 = arith.constant 4.000000e-02 : f32
    %344 = vector.broadcast %cst_296 : f32 to vector<1x8xf32>
    %345 = arith.mulf %343, %344 : vector<1x8xf32>
    %c0_297 = arith.constant 0 : index
    %c20 = arith.constant 20 : index
    %c0_298 = arith.constant 0 : index
    %346 = vector.load %arg2[%c0_297, %c20, %c0_298] : memref<1x32x8xf32, #tpu.memory_space<vmem>>, vector<1x1x8xf32>
    %347 = vector.shape_cast %346 : vector<1x1x8xf32> to vector<1x8xf32>
    %c0_299 = arith.constant 0 : index
    %c20_300 = arith.constant 20 : index
    %c0_301 = arith.constant 0 : index
    %348 = vector.load %arg4[%c0_299, %c20_300, %c0_301] : memref<1x32x8xf32, #tpu.memory_space<vmem>>, vector<1x1x8xf32>
    %349 = vector.shape_cast %348 : vector<1x1x8xf32> to vector<1x8xf32>
    %350 = vector.shape_cast %345 : vector<1x8xf32> to vector<1x1x8xf32>
    tpu.vector_store %arg4[%c0_299, %c20_300, %c0_301], %350 {strides = array<i32>} : memref<1x32x8xf32, #tpu.memory_space<vmem>>, vector<1x1x8xf32>,
    %351 = arith.subf %347, %345 : vector<1x8xf32>
    %c0_302 = arith.constant 0 : index
    %c20_303 = arith.constant 20 : index
    %c0_304 = arith.constant 0 : index
    %352 = vector.load %arg3[%c0_302, %c20_303, %c0_304] : memref<1x32x8xf32, #tpu.memory_space<vmem>>, vector<1x1x8xf32>
    %353 = vector.shape_cast %352 : vector<1x1x8xf32> to vector<1x8xf32>
    %354 = vector.shape_cast %351 : vector<1x8xf32> to vector<1x1x8xf32>
    tpu.vector_store %arg3[%c0_302, %c20_303, %c0_304], %354 {strides = array<i32>} : memref<1x32x8xf32, #tpu.memory_space<vmem>>, vector<1x1x8xf32>,
    %c0_305 = arith.constant 0 : index
    %c9_306 = arith.constant 9 : index
    %c0_307 = arith.constant 0 : index
    %355 = vector.load %arg2[%c0_305, %c9_306, %c0_307] : memref<1x32x8xf32, #tpu.memory_space<vmem>>, vector<1x23x8xf32>
    %356 = vector.shape_cast %355 : vector<1x23x8xf32> to vector<23x8xf32>
    %cst_308 = arith.constant dense<0.000000e+00> : vector<8xf32>
    %357 = vector.multi_reduction <add>, %356, %cst_308 [0] : vector<23x8xf32> to vector<8xf32>
    %358 = vector.shape_cast %357 : vector<8xf32> to vector<1x8xf32>
    %c0_309 = arith.constant 0 : index
    %c31_310 = arith.constant 31 : index
    %c0_311 = arith.constant 0 : index
    %359 = vector.load %arg2[%c0_309, %c31_310, %c0_311] : memref<1x32x8xf32, #tpu.memory_space<vmem>>, vector<1x1x8xf32>
    %360 = vector.shape_cast %359 : vector<1x1x8xf32> to vector<1x8xf32>
    %cst_312 = arith.constant 2.000000e+00 : f32
    %361 = vector.broadcast %cst_312 : f32 to vector<1x8xf32>
    %362 = arith.mulf %361, %360 : vector<1x8xf32>
    %363 = arith.addf %358, %362 : vector<1x8xf32>
    %cst_313 = arith.constant 4.000000e-02 : f32
    %364 = vector.broadcast %cst_313 : f32 to vector<1x8xf32>
    %365 = arith.mulf %363, %364 : vector<1x8xf32>
    %c0_314 = arith.constant 0 : index
    %c21 = arith.constant 21 : index
    %c0_315 = arith.constant 0 : index
    %366 = vector.load %arg2[%c0_314, %c21, %c0_315] : memref<1x32x8xf32, #tpu.memory_space<vmem>>, vector<1x1x8xf32>
    %367 = vector.shape_cast %366 : vector<1x1x8xf32> to vector<1x8xf32>
    %c0_316 = arith.constant 0 : index
    %c21_317 = arith.constant 21 : index
    %c0_318 = arith.constant 0 : index
    %368 = vector.load %arg4[%c0_316, %c21_317, %c0_318] : memref<1x32x8xf32, #tpu.memory_space<vmem>>, vector<1x1x8xf32>
    %369 = vector.shape_cast %368 : vector<1x1x8xf32> to vector<1x8xf32>
    %370 = vector.shape_cast %365 : vector<1x8xf32> to vector<1x1x8xf32>
    tpu.vector_store %arg4[%c0_316, %c21_317, %c0_318], %370 {strides = array<i32>} : memref<1x32x8xf32, #tpu.memory_space<vmem>>, vector<1x1x8xf32>,
    %371 = arith.subf %367, %365 : vector<1x8xf32>
    %c0_319 = arith.constant 0 : index
    %c21_320 = arith.constant 21 : index
    %c0_321 = arith.constant 0 : index
    %372 = vector.load %arg3[%c0_319, %c21_320, %c0_321] : memref<1x32x8xf32, #tpu.memory_space<vmem>>, vector<1x1x8xf32>
    %373 = vector.shape_cast %372 : vector<1x1x8xf32> to vector<1x8xf32>
    %374 = vector.shape_cast %371 : vector<1x8xf32> to vector<1x1x8xf32>
    tpu.vector_store %arg3[%c0_319, %c21_320, %c0_321], %374 {strides = array<i32>} : memref<1x32x8xf32, #tpu.memory_space<vmem>>, vector<1x1x8xf32>,
    %c0_322 = arith.constant 0 : index
    %c10_323 = arith.constant 10 : index
    %c0_324 = arith.constant 0 : index
    %375 = vector.load %arg2[%c0_322, %c10_323, %c0_324] : memref<1x32x8xf32, #tpu.memory_space<vmem>>, vector<1x22x8xf32>
    %376 = vector.shape_cast %375 : vector<1x22x8xf32> to vector<22x8xf32>
    %cst_325 = arith.constant dense<0.000000e+00> : vector<8xf32>
    %377 = vector.multi_reduction <add>, %376, %cst_325 [0] : vector<22x8xf32> to vector<8xf32>
    %378 = vector.shape_cast %377 : vector<8xf32> to vector<1x8xf32>
    %c0_326 = arith.constant 0 : index
    %c31_327 = arith.constant 31 : index
    %c0_328 = arith.constant 0 : index
    %379 = vector.load %arg2[%c0_326, %c31_327, %c0_328] : memref<1x32x8xf32, #tpu.memory_space<vmem>>, vector<1x1x8xf32>
    %380 = vector.shape_cast %379 : vector<1x1x8xf32> to vector<1x8xf32>
    %cst_329 = arith.constant 3.000000e+00 : f32
    %381 = vector.broadcast %cst_329 : f32 to vector<1x8xf32>
    %382 = arith.mulf %381, %380 : vector<1x8xf32>
    %383 = arith.addf %378, %382 : vector<1x8xf32>
    %cst_330 = arith.constant 4.000000e-02 : f32
    %384 = vector.broadcast %cst_330 : f32 to vector<1x8xf32>
    %385 = arith.mulf %383, %384 : vector<1x8xf32>
    %c0_331 = arith.constant 0 : index
    %c22 = arith.constant 22 : index
    %c0_332 = arith.constant 0 : index
    %386 = vector.load %arg2[%c0_331, %c22, %c0_332] : memref<1x32x8xf32, #tpu.memory_space<vmem>>, vector<1x1x8xf32>
    %387 = vector.shape_cast %386 : vector<1x1x8xf32> to vector<1x8xf32>
    %c0_333 = arith.constant 0 : index
    %c22_334 = arith.constant 22 : index
    %c0_335 = arith.constant 0 : index
    %388 = vector.load %arg4[%c0_333, %c22_334, %c0_335] : memref<1x32x8xf32, #tpu.memory_space<vmem>>, vector<1x1x8xf32>
    %389 = vector.shape_cast %388 : vector<1x1x8xf32> to vector<1x8xf32>
    %390 = vector.shape_cast %385 : vector<1x8xf32> to vector<1x1x8xf32>
    tpu.vector_store %arg4[%c0_333, %c22_334, %c0_335], %390 {strides = array<i32>} : memref<1x32x8xf32, #tpu.memory_space<vmem>>, vector<1x1x8xf32>,
    %391 = arith.subf %387, %385 : vector<1x8xf32>
    %c0_336 = arith.constant 0 : index
    %c22_337 = arith.constant 22 : index
    %c0_338 = arith.constant 0 : index
    %392 = vector.load %arg3[%c0_336, %c22_337, %c0_338] : memref<1x32x8xf32, #tpu.memory_space<vmem>>, vector<1x1x8xf32>
    %393 = vector.shape_cast %392 : vector<1x1x8xf32> to vector<1x8xf32>
    %394 = vector.shape_cast %391 : vector<1x8xf32> to vector<1x1x8xf32>
    tpu.vector_store %arg3[%c0_336, %c22_337, %c0_338], %394 {strides = array<i32>} : memref<1x32x8xf32, #tpu.memory_space<vmem>>, vector<1x1x8xf32>,
    %c0_339 = arith.constant 0 : index
    %c11_340 = arith.constant 11 : index
    %c0_341 = arith.constant 0 : index
    %395 = vector.load %arg2[%c0_339, %c11_340, %c0_341] : memref<1x32x8xf32, #tpu.memory_space<vmem>>, vector<1x21x8xf32>
    %396 = vector.shape_cast %395 : vector<1x21x8xf32> to vector<21x8xf32>
    %cst_342 = arith.constant dense<0.000000e+00> : vector<8xf32>
    %397 = vector.multi_reduction <add>, %396, %cst_342 [0] : vector<21x8xf32> to vector<8xf32>
    %398 = vector.shape_cast %397 : vector<8xf32> to vector<1x8xf32>
    %c0_343 = arith.constant 0 : index
    %c31_344 = arith.constant 31 : index
    %c0_345 = arith.constant 0 : index
    %399 = vector.load %arg2[%c0_343, %c31_344, %c0_345] : memref<1x32x8xf32, #tpu.memory_space<vmem>>, vector<1x1x8xf32>
    %400 = vector.shape_cast %399 : vector<1x1x8xf32> to vector<1x8xf32>
    %cst_346 = arith.constant 4.000000e+00 : f32
    %401 = vector.broadcast %cst_346 : f32 to vector<1x8xf32>
    %402 = arith.mulf %401, %400 : vector<1x8xf32>
    %403 = arith.addf %398, %402 : vector<1x8xf32>
    %cst_347 = arith.constant 4.000000e-02 : f32
    %404 = vector.broadcast %cst_347 : f32 to vector<1x8xf32>
    %405 = arith.mulf %403, %404 : vector<1x8xf32>
    %c0_348 = arith.constant 0 : index
    %c23 = arith.constant 23 : index
    %c0_349 = arith.constant 0 : index
    %406 = vector.load %arg2[%c0_348, %c23, %c0_349] : memref<1x32x8xf32, #tpu.memory_space<vmem>>, vector<1x1x8xf32>
    %407 = vector.shape_cast %406 : vector<1x1x8xf32> to vector<1x8xf32>
    %c0_350 = arith.constant 0 : index
    %c23_351 = arith.constant 23 : index
    %c0_352 = arith.constant 0 : index
    %408 = vector.load %arg4[%c0_350, %c23_351, %c0_352] : memref<1x32x8xf32, #tpu.memory_space<vmem>>, vector<1x1x8xf32>
    %409 = vector.shape_cast %408 : vector<1x1x8xf32> to vector<1x8xf32>
    %410 = vector.shape_cast %405 : vector<1x8xf32> to vector<1x1x8xf32>
    tpu.vector_store %arg4[%c0_350, %c23_351, %c0_352], %410 {strides = array<i32>} : memref<1x32x8xf32, #tpu.memory_space<vmem>>, vector<1x1x8xf32>,
    %411 = arith.subf %407, %405 : vector<1x8xf32>
    %c0_353 = arith.constant 0 : index
    %c23_354 = arith.constant 23 : index
    %c0_355 = arith.constant 0 : index
    %412 = vector.load %arg3[%c0_353, %c23_354, %c0_355] : memref<1x32x8xf32, #tpu.memory_space<vmem>>, vector<1x1x8xf32>
    %413 = vector.shape_cast %412 : vector<1x1x8xf32> to vector<1x8xf32>
    %414 = vector.shape_cast %411 : vector<1x8xf32> to vector<1x1x8xf32>
    tpu.vector_store %arg3[%c0_353, %c23_354, %c0_355], %414 {strides = array<i32>} : memref<1x32x8xf32, #tpu.memory_space<vmem>>, vector<1x1x8xf32>,
    %c0_356 = arith.constant 0 : index
    %c12_357 = arith.constant 12 : index
    %c0_358 = arith.constant 0 : index
    %415 = vector.load %arg2[%c0_356, %c12_357, %c0_358] : memref<1x32x8xf32, #tpu.memory_space<vmem>>, vector<1x20x8xf32>
    %416 = vector.shape_cast %415 : vector<1x20x8xf32> to vector<20x8xf32>
    %cst_359 = arith.constant dense<0.000000e+00> : vector<8xf32>
    %417 = vector.multi_reduction <add>, %416, %cst_359 [0] : vector<20x8xf32> to vector<8xf32>
    %418 = vector.shape_cast %417 : vector<8xf32> to vector<1x8xf32>
    %c0_360 = arith.constant 0 : index
    %c31_361 = arith.constant 31 : index
    %c0_362 = arith.constant 0 : index
    %419 = vector.load %arg2[%c0_360, %c31_361, %c0_362] : memref<1x32x8xf32, #tpu.memory_space<vmem>>, vector<1x1x8xf32>
    %420 = vector.shape_cast %419 : vector<1x1x8xf32> to vector<1x8xf32>
    %cst_363 = arith.constant 5.000000e+00 : f32
    %421 = vector.broadcast %cst_363 : f32 to vector<1x8xf32>
    %422 = arith.mulf %421, %420 : vector<1x8xf32>
    %423 = arith.addf %418, %422 : vector<1x8xf32>
    %cst_364 = arith.constant 4.000000e-02 : f32
    %424 = vector.broadcast %cst_364 : f32 to vector<1x8xf32>
    %425 = arith.mulf %423, %424 : vector<1x8xf32>
    %c0_365 = arith.constant 0 : index
    %c24_366 = arith.constant 24 : index
    %c0_367 = arith.constant 0 : index
    %426 = vector.load %arg2[%c0_365, %c24_366, %c0_367] : memref<1x32x8xf32, #tpu.memory_space<vmem>>, vector<1x1x8xf32>
    %427 = vector.shape_cast %426 : vector<1x1x8xf32> to vector<1x8xf32>
    %c0_368 = arith.constant 0 : index
    %c24_369 = arith.constant 24 : index
    %c0_370 = arith.constant 0 : index
    %428 = vector.load %arg4[%c0_368, %c24_369, %c0_370] : memref<1x32x8xf32, #tpu.memory_space<vmem>>, vector<1x1x8xf32>
    %429 = vector.shape_cast %428 : vector<1x1x8xf32> to vector<1x8xf32>
    %430 = vector.shape_cast %425 : vector<1x8xf32> to vector<1x1x8xf32>
    tpu.vector_store %arg4[%c0_368, %c24_369, %c0_370], %430 {strides = array<i32>} : memref<1x32x8xf32, #tpu.memory_space<vmem>>, vector<1x1x8xf32>,
    %431 = arith.subf %427, %425 : vector<1x8xf32>
    %c0_371 = arith.constant 0 : index
    %c24_372 = arith.constant 24 : index
    %c0_373 = arith.constant 0 : index
    %432 = vector.load %arg3[%c0_371, %c24_372, %c0_373] : memref<1x32x8xf32, #tpu.memory_space<vmem>>, vector<1x1x8xf32>
    %433 = vector.shape_cast %432 : vector<1x1x8xf32> to vector<1x8xf32>
    %434 = vector.shape_cast %431 : vector<1x8xf32> to vector<1x1x8xf32>
    tpu.vector_store %arg3[%c0_371, %c24_372, %c0_373], %434 {strides = array<i32>} : memref<1x32x8xf32, #tpu.memory_space<vmem>>, vector<1x1x8xf32>,
    %c0_374 = arith.constant 0 : index
    %c13_375 = arith.constant 13 : index
    %c0_376 = arith.constant 0 : index
    %435 = vector.load %arg2[%c0_374, %c13_375, %c0_376] : memref<1x32x8xf32, #tpu.memory_space<vmem>>, vector<1x19x8xf32>
    %436 = vector.shape_cast %435 : vector<1x19x8xf32> to vector<19x8xf32>
    %cst_377 = arith.constant dense<0.000000e+00> : vector<8xf32>
    %437 = vector.multi_reduction <add>, %436, %cst_377 [0] : vector<19x8xf32> to vector<8xf32>
    %438 = vector.shape_cast %437 : vector<8xf32> to vector<1x8xf32>
    %c0_378 = arith.constant 0 : index
    %c31_379 = arith.constant 31 : index
    %c0_380 = arith.constant 0 : index
    %439 = vector.load %arg2[%c0_378, %c31_379, %c0_380] : memref<1x32x8xf32, #tpu.memory_space<vmem>>, vector<1x1x8xf32>
    %440 = vector.shape_cast %439 : vector<1x1x8xf32> to vector<1x8xf32>
    %cst_381 = arith.constant 6.000000e+00 : f32
    %441 = vector.broadcast %cst_381 : f32 to vector<1x8xf32>
    %442 = arith.mulf %441, %440 : vector<1x8xf32>
    %443 = arith.addf %438, %442 : vector<1x8xf32>
    %cst_382 = arith.constant 4.000000e-02 : f32
    %444 = vector.broadcast %cst_382 : f32 to vector<1x8xf32>
    %445 = arith.mulf %443, %444 : vector<1x8xf32>
    %c0_383 = arith.constant 0 : index
    %c25 = arith.constant 25 : index
    %c0_384 = arith.constant 0 : index
    %446 = vector.load %arg2[%c0_383, %c25, %c0_384] : memref<1x32x8xf32, #tpu.memory_space<vmem>>, vector<1x1x8xf32>
    %447 = vector.shape_cast %446 : vector<1x1x8xf32> to vector<1x8xf32>
    %c0_385 = arith.constant 0 : index
    %c25_386 = arith.constant 25 : index
    %c0_387 = arith.constant 0 : index
    %448 = vector.load %arg4[%c0_385, %c25_386, %c0_387] : memref<1x32x8xf32, #tpu.memory_space<vmem>>, vector<1x1x8xf32>
    %449 = vector.shape_cast %448 : vector<1x1x8xf32> to vector<1x8xf32>
    %450 = vector.shape_cast %445 : vector<1x8xf32> to vector<1x1x8xf32>
    tpu.vector_store %arg4[%c0_385, %c25_386, %c0_387], %450 {strides = array<i32>} : memref<1x32x8xf32, #tpu.memory_space<vmem>>, vector<1x1x8xf32>,
    %451 = arith.subf %447, %445 : vector<1x8xf32>
    %c0_388 = arith.constant 0 : index
    %c25_389 = arith.constant 25 : index
    %c0_390 = arith.constant 0 : index
    %452 = vector.load %arg3[%c0_388, %c25_389, %c0_390] : memref<1x32x8xf32, #tpu.memory_space<vmem>>, vector<1x1x8xf32>
    %453 = vector.shape_cast %452 : vector<1x1x8xf32> to vector<1x8xf32>
    %454 = vector.shape_cast %451 : vector<1x8xf32> to vector<1x1x8xf32>
    tpu.vector_store %arg3[%c0_388, %c25_389, %c0_390], %454 {strides = array<i32>} : memref<1x32x8xf32, #tpu.memory_space<vmem>>, vector<1x1x8xf32>,
    %c0_391 = arith.constant 0 : index
    %c14_392 = arith.constant 14 : index
    %c0_393 = arith.constant 0 : index
    %455 = vector.load %arg2[%c0_391, %c14_392, %c0_393] : memref<1x32x8xf32, #tpu.memory_space<vmem>>, vector<1x18x8xf32>
    %456 = vector.shape_cast %455 : vector<1x18x8xf32> to vector<18x8xf32>
    %cst_394 = arith.constant dense<0.000000e+00> : vector<8xf32>
    %457 = vector.multi_reduction <add>, %456, %cst_394 [0] : vector<18x8xf32> to vector<8xf32>
    %458 = vector.shape_cast %457 : vector<8xf32> to vector<1x8xf32>
    %c0_395 = arith.constant 0 : index
    %c31_396 = arith.constant 31 : index
    %c0_397 = arith.constant 0 : index
    %459 = vector.load %arg2[%c0_395, %c31_396, %c0_397] : memref<1x32x8xf32, #tpu.memory_space<vmem>>, vector<1x1x8xf32>
    %460 = vector.shape_cast %459 : vector<1x1x8xf32> to vector<1x8xf32>
    %cst_398 = arith.constant 7.000000e+00 : f32
    %461 = vector.broadcast %cst_398 : f32 to vector<1x8xf32>
    %462 = arith.mulf %461, %460 : vector<1x8xf32>
    %463 = arith.addf %458, %462 : vector<1x8xf32>
    %cst_399 = arith.constant 4.000000e-02 : f32
    %464 = vector.broadcast %cst_399 : f32 to vector<1x8xf32>
    %465 = arith.mulf %463, %464 : vector<1x8xf32>
    %c0_400 = arith.constant 0 : index
    %c26 = arith.constant 26 : index
    %c0_401 = arith.constant 0 : index
    %466 = vector.load %arg2[%c0_400, %c26, %c0_401] : memref<1x32x8xf32, #tpu.memory_space<vmem>>, vector<1x1x8xf32>
    %467 = vector.shape_cast %466 : vector<1x1x8xf32> to vector<1x8xf32>
    %c0_402 = arith.constant 0 : index
    %c26_403 = arith.constant 26 : index
    %c0_404 = arith.constant 0 : index
    %468 = vector.load %arg4[%c0_402, %c26_403, %c0_404] : memref<1x32x8xf32, #tpu.memory_space<vmem>>, vector<1x1x8xf32>
    %469 = vector.shape_cast %468 : vector<1x1x8xf32> to vector<1x8xf32>
    %470 = vector.shape_cast %465 : vector<1x8xf32> to vector<1x1x8xf32>
    tpu.vector_store %arg4[%c0_402, %c26_403, %c0_404], %470 {strides = array<i32>} : memref<1x32x8xf32, #tpu.memory_space<vmem>>, vector<1x1x8xf32>,
    %471 = arith.subf %467, %465 : vector<1x8xf32>
    %c0_405 = arith.constant 0 : index
    %c26_406 = arith.constant 26 : index
    %c0_407 = arith.constant 0 : index
    %472 = vector.load %arg3[%c0_405, %c26_406, %c0_407] : memref<1x32x8xf32, #tpu.memory_space<vmem>>, vector<1x1x8xf32>
    %473 = vector.shape_cast %472 : vector<1x1x8xf32> to vector<1x8xf32>
    %474 = vector.shape_cast %471 : vector<1x8xf32> to vector<1x1x8xf32>
    tpu.vector_store %arg3[%c0_405, %c26_406, %c0_407], %474 {strides = array<i32>} : memref<1x32x8xf32, #tpu.memory_space<vmem>>, vector<1x1x8xf32>,
    %c0_408 = arith.constant 0 : index
    %c15_409 = arith.constant 15 : index
    %c0_410 = arith.constant 0 : index
    %475 = vector.load %arg2[%c0_408, %c15_409, %c0_410] : memref<1x32x8xf32, #tpu.memory_space<vmem>>, vector<1x17x8xf32>
    %476 = vector.shape_cast %475 : vector<1x17x8xf32> to vector<17x8xf32>
    %cst_411 = arith.constant dense<0.000000e+00> : vector<8xf32>
    %477 = vector.multi_reduction <add>, %476, %cst_411 [0] : vector<17x8xf32> to vector<8xf32>
    %478 = vector.shape_cast %477 : vector<8xf32> to vector<1x8xf32>
    %c0_412 = arith.constant 0 : index
    %c31_413 = arith.constant 31 : index
    %c0_414 = arith.constant 0 : index
    %479 = vector.load %arg2[%c0_412, %c31_413, %c0_414] : memref<1x32x8xf32, #tpu.memory_space<vmem>>, vector<1x1x8xf32>
    %480 = vector.shape_cast %479 : vector<1x1x8xf32> to vector<1x8xf32>
    %cst_415 = arith.constant 8.000000e+00 : f32
    %481 = vector.broadcast %cst_415 : f32 to vector<1x8xf32>
    %482 = arith.mulf %481, %480 : vector<1x8xf32>
    %483 = arith.addf %478, %482 : vector<1x8xf32>
    %cst_416 = arith.constant 4.000000e-02 : f32
    %484 = vector.broadcast %cst_416 : f32 to vector<1x8xf32>
    %485 = arith.mulf %483, %484 : vector<1x8xf32>
    %c0_417 = arith.constant 0 : index
    %c27 = arith.constant 27 : index
    %c0_418 = arith.constant 0 : index
    %486 = vector.load %arg2[%c0_417, %c27, %c0_418] : memref<1x32x8xf32, #tpu.memory_space<vmem>>, vector<1x1x8xf32>
    %487 = vector.shape_cast %486 : vector<1x1x8xf32> to vector<1x8xf32>
    %c0_419 = arith.constant 0 : index
    %c27_420 = arith.constant 27 : index
    %c0_421 = arith.constant 0 : index
    %488 = vector.load %arg4[%c0_419, %c27_420, %c0_421] : memref<1x32x8xf32, #tpu.memory_space<vmem>>, vector<1x1x8xf32>
    %489 = vector.shape_cast %488 : vector<1x1x8xf32> to vector<1x8xf32>
    %490 = vector.shape_cast %485 : vector<1x8xf32> to vector<1x1x8xf32>
    tpu.vector_store %arg4[%c0_419, %c27_420, %c0_421], %490 {strides = array<i32>} : memref<1x32x8xf32, #tpu.memory_space<vmem>>, vector<1x1x8xf32>,
    %491 = arith.subf %487, %485 : vector<1x8xf32>
    %c0_422 = arith.constant 0 : index
    %c27_423 = arith.constant 27 : index
    %c0_424 = arith.constant 0 : index
    %492 = vector.load %arg3[%c0_422, %c27_423, %c0_424] : memref<1x32x8xf32, #tpu.memory_space<vmem>>, vector<1x1x8xf32>
    %493 = vector.shape_cast %492 : vector<1x1x8xf32> to vector<1x8xf32>
    %494 = vector.shape_cast %491 : vector<1x8xf32> to vector<1x1x8xf32>
    tpu.vector_store %arg3[%c0_422, %c27_423, %c0_424], %494 {strides = array<i32>} : memref<1x32x8xf32, #tpu.memory_space<vmem>>, vector<1x1x8xf32>,
    %c0_425 = arith.constant 0 : index
    %c16_426 = arith.constant 16 : index
    %c0_427 = arith.constant 0 : index
    %495 = vector.load %arg2[%c0_425, %c16_426, %c0_427] : memref<1x32x8xf32, #tpu.memory_space<vmem>>, vector<1x16x8xf32>
    %496 = vector.shape_cast %495 : vector<1x16x8xf32> to vector<16x8xf32>
    %cst_428 = arith.constant dense<0.000000e+00> : vector<8xf32>
    %497 = vector.multi_reduction <add>, %496, %cst_428 [0] : vector<16x8xf32> to vector<8xf32>
    %498 = vector.shape_cast %497 : vector<8xf32> to vector<1x8xf32>
    %c0_429 = arith.constant 0 : index
    %c31_430 = arith.constant 31 : index
    %c0_431 = arith.constant 0 : index
    %499 = vector.load %arg2[%c0_429, %c31_430, %c0_431] : memref<1x32x8xf32, #tpu.memory_space<vmem>>, vector<1x1x8xf32>
    %500 = vector.shape_cast %499 : vector<1x1x8xf32> to vector<1x8xf32>
    %cst_432 = arith.constant 9.000000e+00 : f32
    %501 = vector.broadcast %cst_432 : f32 to vector<1x8xf32>
    %502 = arith.mulf %501, %500 : vector<1x8xf32>
    %503 = arith.addf %498, %502 : vector<1x8xf32>
    %cst_433 = arith.constant 4.000000e-02 : f32
    %504 = vector.broadcast %cst_433 : f32 to vector<1x8xf32>
    %505 = arith.mulf %503, %504 : vector<1x8xf32>
    %c0_434 = arith.constant 0 : index
    %c28 = arith.constant 28 : index
    %c0_435 = arith.constant 0 : index
    %506 = vector.load %arg2[%c0_434, %c28, %c0_435] : memref<1x32x8xf32, #tpu.memory_space<vmem>>, vector<1x1x8xf32>
    %507 = vector.shape_cast %506 : vector<1x1x8xf32> to vector<1x8xf32>
    %c0_436 = arith.constant 0 : index
    %c28_437 = arith.constant 28 : index
    %c0_438 = arith.constant 0 : index
    %508 = vector.load %arg4[%c0_436, %c28_437, %c0_438] : memref<1x32x8xf32, #tpu.memory_space<vmem>>, vector<1x1x8xf32>
    %509 = vector.shape_cast %508 : vector<1x1x8xf32> to vector<1x8xf32>
    %510 = vector.shape_cast %505 : vector<1x8xf32> to vector<1x1x8xf32>
    tpu.vector_store %arg4[%c0_436, %c28_437, %c0_438], %510 {strides = array<i32>} : memref<1x32x8xf32, #tpu.memory_space<vmem>>, vector<1x1x8xf32>,
    %511 = arith.subf %507, %505 : vector<1x8xf32>
    %c0_439 = arith.constant 0 : index
    %c28_440 = arith.constant 28 : index
    %c0_441 = arith.constant 0 : index
    %512 = vector.load %arg3[%c0_439, %c28_440, %c0_441] : memref<1x32x8xf32, #tpu.memory_space<vmem>>, vector<1x1x8xf32>
    %513 = vector.shape_cast %512 : vector<1x1x8xf32> to vector<1x8xf32>
    %514 = vector.shape_cast %511 : vector<1x8xf32> to vector<1x1x8xf32>
    tpu.vector_store %arg3[%c0_439, %c28_440, %c0_441], %514 {strides = array<i32>} : memref<1x32x8xf32, #tpu.memory_space<vmem>>, vector<1x1x8xf32>,
    %c0_442 = arith.constant 0 : index
    %c17 = arith.constant 17 : index
    %c0_443 = arith.constant 0 : index
    %515 = vector.load %arg2[%c0_442, %c17, %c0_443] : memref<1x32x8xf32, #tpu.memory_space<vmem>>, vector<1x15x8xf32>
    %516 = vector.shape_cast %515 : vector<1x15x8xf32> to vector<15x8xf32>
    %cst_444 = arith.constant dense<0.000000e+00> : vector<8xf32>
    %517 = vector.multi_reduction <add>, %516, %cst_444 [0] : vector<15x8xf32> to vector<8xf32>
    %518 = vector.shape_cast %517 : vector<8xf32> to vector<1x8xf32>
    %c0_445 = arith.constant 0 : index
    %c31_446 = arith.constant 31 : index
    %c0_447 = arith.constant 0 : index
    %519 = vector.load %arg2[%c0_445, %c31_446, %c0_447] : memref<1x32x8xf32, #tpu.memory_space<vmem>>, vector<1x1x8xf32>
    %520 = vector.shape_cast %519 : vector<1x1x8xf32> to vector<1x8xf32>
    %cst_448 = arith.constant 1.000000e+01 : f32
    %521 = vector.broadcast %cst_448 : f32 to vector<1x8xf32>
    %522 = arith.mulf %521, %520 : vector<1x8xf32>
    %523 = arith.addf %518, %522 : vector<1x8xf32>
    %cst_449 = arith.constant 4.000000e-02 : f32
    %524 = vector.broadcast %cst_449 : f32 to vector<1x8xf32>
    %525 = arith.mulf %523, %524 : vector<1x8xf32>
    %c0_450 = arith.constant 0 : index
    %c29 = arith.constant 29 : index
    %c0_451 = arith.constant 0 : index
    %526 = vector.load %arg2[%c0_450, %c29, %c0_451] : memref<1x32x8xf32, #tpu.memory_space<vmem>>, vector<1x1x8xf32>
    %527 = vector.shape_cast %526 : vector<1x1x8xf32> to vector<1x8xf32>
    %c0_452 = arith.constant 0 : index
    %c29_453 = arith.constant 29 : index
    %c0_454 = arith.constant 0 : index
    %528 = vector.load %arg4[%c0_452, %c29_453, %c0_454] : memref<1x32x8xf32, #tpu.memory_space<vmem>>, vector<1x1x8xf32>
    %529 = vector.shape_cast %528 : vector<1x1x8xf32> to vector<1x8xf32>
    %530 = vector.shape_cast %525 : vector<1x8xf32> to vector<1x1x8xf32>
    tpu.vector_store %arg4[%c0_452, %c29_453, %c0_454], %530 {strides = array<i32>} : memref<1x32x8xf32, #tpu.memory_space<vmem>>, vector<1x1x8xf32>,
    %531 = arith.subf %527, %525 : vector<1x8xf32>
    %c0_455 = arith.constant 0 : index
    %c29_456 = arith.constant 29 : index
    %c0_457 = arith.constant 0 : index
    %532 = vector.load %arg3[%c0_455, %c29_456, %c0_457] : memref<1x32x8xf32, #tpu.memory_space<vmem>>, vector<1x1x8xf32>
    %533 = vector.shape_cast %532 : vector<1x1x8xf32> to vector<1x8xf32>
    %534 = vector.shape_cast %531 : vector<1x8xf32> to vector<1x1x8xf32>
    tpu.vector_store %arg3[%c0_455, %c29_456, %c0_457], %534 {strides = array<i32>} : memref<1x32x8xf32, #tpu.memory_space<vmem>>, vector<1x1x8xf32>,
    %c0_458 = arith.constant 0 : index
    %c18 = arith.constant 18 : index
    %c0_459 = arith.constant 0 : index
    %535 = vector.load %arg2[%c0_458, %c18, %c0_459] : memref<1x32x8xf32, #tpu.memory_space<vmem>>, vector<1x14x8xf32>
    %536 = vector.shape_cast %535 : vector<1x14x8xf32> to vector<14x8xf32>
    %cst_460 = arith.constant dense<0.000000e+00> : vector<8xf32>
    %537 = vector.multi_reduction <add>, %536, %cst_460 [0] : vector<14x8xf32> to vector<8xf32>
    %538 = vector.shape_cast %537 : vector<8xf32> to vector<1x8xf32>
    %c0_461 = arith.constant 0 : index
    %c31_462 = arith.constant 31 : index
    %c0_463 = arith.constant 0 : index
    %539 = vector.load %arg2[%c0_461, %c31_462, %c0_463] : memref<1x32x8xf32, #tpu.memory_space<vmem>>, vector<1x1x8xf32>
    %540 = vector.shape_cast %539 : vector<1x1x8xf32> to vector<1x8xf32>
    %cst_464 = arith.constant 1.100000e+01 : f32
    %541 = vector.broadcast %cst_464 : f32 to vector<1x8xf32>
    %542 = arith.mulf %541, %540 : vector<1x8xf32>
    %543 = arith.addf %538, %542 : vector<1x8xf32>
    %cst_465 = arith.constant 4.000000e-02 : f32
    %544 = vector.broadcast %cst_465 : f32 to vector<1x8xf32>
    %545 = arith.mulf %543, %544 : vector<1x8xf32>
    %c0_466 = arith.constant 0 : index
    %c30 = arith.constant 30 : index
    %c0_467 = arith.constant 0 : index
    %546 = vector.load %arg2[%c0_466, %c30, %c0_467] : memref<1x32x8xf32, #tpu.memory_space<vmem>>, vector<1x1x8xf32>
    %547 = vector.shape_cast %546 : vector<1x1x8xf32> to vector<1x8xf32>
    %c0_468 = arith.constant 0 : index
    %c30_469 = arith.constant 30 : index
    %c0_470 = arith.constant 0 : index
    %548 = vector.load %arg4[%c0_468, %c30_469, %c0_470] : memref<1x32x8xf32, #tpu.memory_space<vmem>>, vector<1x1x8xf32>
    %549 = vector.shape_cast %548 : vector<1x1x8xf32> to vector<1x8xf32>
    %550 = vector.shape_cast %545 : vector<1x8xf32> to vector<1x1x8xf32>
    tpu.vector_store %arg4[%c0_468, %c30_469, %c0_470], %550 {strides = array<i32>} : memref<1x32x8xf32, #tpu.memory_space<vmem>>, vector<1x1x8xf32>,
    %551 = arith.subf %547, %545 : vector<1x8xf32>
    %c0_471 = arith.constant 0 : index
    %c30_472 = arith.constant 30 : index
    %c0_473 = arith.constant 0 : index
    %552 = vector.load %arg3[%c0_471, %c30_472, %c0_473] : memref<1x32x8xf32, #tpu.memory_space<vmem>>, vector<1x1x8xf32>
    %553 = vector.shape_cast %552 : vector<1x1x8xf32> to vector<1x8xf32>
    %554 = vector.shape_cast %551 : vector<1x8xf32> to vector<1x1x8xf32>
    tpu.vector_store %arg3[%c0_471, %c30_472, %c0_473], %554 {strides = array<i32>} : memref<1x32x8xf32, #tpu.memory_space<vmem>>, vector<1x1x8xf32>,
    %c0_474 = arith.constant 0 : index
    %c19_475 = arith.constant 19 : index
    %c0_476 = arith.constant 0 : index
    %555 = vector.load %arg2[%c0_474, %c19_475, %c0_476] : memref<1x32x8xf32, #tpu.memory_space<vmem>>, vector<1x13x8xf32>
    %556 = vector.shape_cast %555 : vector<1x13x8xf32> to vector<13x8xf32>
    %cst_477 = arith.constant dense<0.000000e+00> : vector<8xf32>
    %557 = vector.multi_reduction <add>, %556, %cst_477 [0] : vector<13x8xf32> to vector<8xf32>
    %558 = vector.shape_cast %557 : vector<8xf32> to vector<1x8xf32>
    %c0_478 = arith.constant 0 : index
    %c31_479 = arith.constant 31 : index
    %c0_480 = arith.constant 0 : index
    %559 = vector.load %arg2[%c0_478, %c31_479, %c0_480] : memref<1x32x8xf32, #tpu.memory_space<vmem>>, vector<1x1x8xf32>
    %560 = vector.shape_cast %559 : vector<1x1x8xf32> to vector<1x8xf32>
    %cst_481 = arith.constant 1.200000e+01 : f32
    %561 = vector.broadcast %cst_481 : f32 to vector<1x8xf32>
    %562 = arith.mulf %561, %560 : vector<1x8xf32>
    %563 = arith.addf %558, %562 : vector<1x8xf32>
    %cst_482 = arith.constant 4.000000e-02 : f32
    %564 = vector.broadcast %cst_482 : f32 to vector<1x8xf32>
    %565 = arith.mulf %563, %564 : vector<1x8xf32>
    %c0_483 = arith.constant 0 : index
    %c31_484 = arith.constant 31 : index
    %c0_485 = arith.constant 0 : index
    %566 = vector.load %arg2[%c0_483, %c31_484, %c0_485] : memref<1x32x8xf32, #tpu.memory_space<vmem>>, vector<1x1x8xf32>
    %567 = vector.shape_cast %566 : vector<1x1x8xf32> to vector<1x8xf32>
    %c0_486 = arith.constant 0 : index
    %c31_487 = arith.constant 31 : index
    %c0_488 = arith.constant 0 : index
    %568 = vector.load %arg4[%c0_486, %c31_487, %c0_488] : memref<1x32x8xf32, #tpu.memory_space<vmem>>, vector<1x1x8xf32>
    %569 = vector.shape_cast %568 : vector<1x1x8xf32> to vector<1x8xf32>
    %570 = vector.shape_cast %565 : vector<1x8xf32> to vector<1x1x8xf32>
    tpu.vector_store %arg4[%c0_486, %c31_487, %c0_488], %570 {strides = array<i32>} : memref<1x32x8xf32, #tpu.memory_space<vmem>>, vector<1x1x8xf32>,
    %571 = arith.subf %567, %565 : vector<1x8xf32>
    %c0_489 = arith.constant 0 : index
    %c31_490 = arith.constant 31 : index
    %c0_491 = arith.constant 0 : index
    %572 = vector.load %arg3[%c0_489, %c31_490, %c0_491] : memref<1x32x8xf32, #tpu.memory_space<vmem>>, vector<1x1x8xf32>
    %573 = vector.shape_cast %572 : vector<1x1x8xf32> to vector<1x8xf32>
    %574 = vector.shape_cast %571 : vector<1x8xf32> to vector<1x1x8xf32>
    tpu.vector_store %arg3[%c0_489, %c31_490, %c0_491], %574 {strides = array<i32>} : memref<1x32x8xf32, #tpu.memory_space<vmem>>, vector<1x1x8xf32>,
    return
  }
  func.func @transform_0(%arg0: i32, %arg1: i32) -> (i32, i32, i32) {
    %c0_i32 = arith.constant 0 : i32
    %c0_i32_0 = arith.constant 0 : i32
    return %arg0, %c0_i32, %arg1 : i32, i32, i32
  }
  func.func @transform_1(%arg0: i32, %arg1: i32) -> (i32, i32, i32) {
    %c0_i32 = arith.constant 0 : i32
    %c0_i32_0 = arith.constant 0 : i32
    return %arg0, %c0_i32, %arg1 : i32, i32, i32
  }
  func.func @transform_2(%arg0: i32, %arg1: i32) -> (i32, i32, i32) {
    %c0_i32 = arith.constant 0 : i32
    %c0_i32_0 = arith.constant 0 : i32
    return %arg0, %c0_i32, %arg1 : i32, i32, i32
  }
}

</mosaic_0001>

<llo_original>
// kernel: tpu_custom_call.1
$region0: #{tpu_custom_call.1}
  #allocation0 [shape = 'u32[]', space=smem, size = 0x4, offset = 0x4, fixed_abs, tag = 'smem constant byte address 0x4 - core index']
  #allocation1 [shape = 'u32[144,128]{1,0:T(1,128)}', space=vmem, size = 0x12000, scoped, tag = 'internal scratch']
  #allocation2 [shape = 'f32[28,8]{1,0:T(8,128)}', space=vmem, size = 0x4000, scoped, tag = 'scratch operand']
  %s0 = inlined_call_operand.vmem [shape: f32[2,32,8], index: 0, kind: input, shape index: {}]
  %s1 = inlined_call_operand.vmem [shape: f32[2,32,8], index: 1, kind: output, shape index: {0}]
  %s2 = inlined_call_operand.vmem [shape: f32[2,32,8], index: 2, kind: output, shape index: {1}]
  %3 = xla_tuple %s1, %s2
  %s4 = sld [smem:[#allocation0]]
  $region45: #{tpu_custom_call.1} parent=0
    _
  %s6 = ssub.s32 1, %s4
  %s7 = scalar_select 0, %s6, %s4
  loop: start=0, step=1, limit=4
  $region2: #{tpu_custom_call.1} parent=0 // loop_pre_header
    _
  $region3: #{tpu_custom_call.1} parent=0 // loop_header
    %s9 = sphi 0, %s13
    %p10 = scmp.ge.s32.totalorder %s9, 4
    %s16 = sphi 0, %s28
    %s17 = sphi 0, %s24
    %s18 = sphi 0, %s16
    %s19 = sphi 0, %s17
    %s20 = sphi 0, %s18
    %s21 = sphi 0, %s19
    %s33 = sphi 0, %s35
    %s36 = sphi 0, %s33
    %s37 = sphi 0, %s36
    %s53 = sphi 0, %s37
    %s61 = sphi 0, %s63
    %s64 = sphi 0, %s61
    %s65 = sphi 0, %s64
    %s81 = sphi 0, %s65
    %s89 = sphi 0, %s91
    %s92 = sphi 0, %s89
    %s93 = sphi 0, %s92
    %s109 = sphi 0, %s93
  $region4: #{tpu_custom_call.1} parent=0 // loop_header_branch
    %12 = sbr.rel (%p10) target = $region8
  $region5: #{tpu_custom_call.1} parent=0 // loop_body
    %s14 = ssub.s32 %s9, 1
    %s15 = ssub.s32 %s9, 2
    %s22 = sadd.s32 1, %s17
    %p23 = scmp.ge.s32.totalorder %s22, 1
    %s24 = scalar_select %p23, 0, %s22
    %s25 = sadd.s32 1, %s16
    %s26 = scalar_select %p23, %s25, %s16
    %p27 = scmp.ge.s32.totalorder %s26, 2
    %s28 = scalar_select %p27, 0, %s26
    %s29 = ssub.s32 %s16, %s28
    %s30 = ssub.s32 %s17, %s24
    %s31 = sor.u32 %s29, %s30
    %p32 = scmp.eq.s32.totalorder %s31, 0
    %s34 = sadd.s32 %s33, 1
    %s35 = scalar_select %p32, %s33, %s34
    %p38 = pneg %p32
    %p39 = scmp.eq.s32.totalorder %s9, 1
    %p40 = por %p38, %p39
    %p41 = scmp.ne.s32.totalorder %s33, %s36
    %p42 = scmp.eq.s32.totalorder %s9, 0
    %p43 = por %p41, %p42
    %p44 = scmp.ne.s32.totalorder %s33, %s36
    %p45 = scmp.eq.s32.totalorder %s14, 1
    %p46 = por %p44, %p45
    %p47 = scmp.ne.s32.totalorder %s36, %s37
    %p48 = scmp.eq.s32.totalorder %s14, 0
    %p49 = por %p47, %p48
    %p50 = scmp.ne.s32.totalorder %s36, %s37
    %p51 = scmp.eq.s32.totalorder %s15, 1
    %p52 = por %p50, %p51
    %p54 = scmp.ne.s32.totalorder %s37, %s53
    %p55 = scmp.eq.s32.totalorder %s15, 0
    %p56 = por %p54, %p55
    %s57 = ssub.s32 %s16, %s28
    %s58 = ssub.s32 %s17, %s24
    %s59 = sor.u32 %s57, %s58
    %p60 = scmp.eq.s32.totalorder %s59, 0
    %s62 = sadd.s32 %s61, 1
    %s63 = scalar_select %p60, %s61, %s62
    %p66 = pneg %p60
    %p67 = scmp.eq.s32.totalorder %s9, 1
    %p68 = por %p66, %p67
    %p69 = scmp.ne.s32.totalorder %s61, %s64
    %p70 = scmp.eq.s32.totalorder %s9, 0
    %p71 = por %p69, %p70
    %p72 = scmp.ne.s32.totalorder %s61, %s64
    %p73 = scmp.eq.s32.totalorder %s14, 1
    %p74 = por %p72, %p73
    %p75 = scmp.ne.s32.totalorder %s64, %s65
    %p76 = scmp.eq.s32.totalorder %s14, 0
    %p77 = por %p75, %p76
    %p78 = scmp.ne.s32.totalorder %s64, %s65
    %p79 = scmp.eq.s32.totalorder %s15, 1
    %p80 = por %p78, %p79
    %p82 = scmp.ne.s32.totalorder %s65, %s81
    %p83 = scmp.eq.s32.totalorder %s15, 0
    %p84 = por %p82, %p83
    %s85 = ssub.s32 %s16, %s28
    %s86 = ssub.s32 %s17, %s24
    %s87 = sor.u32 %s85, %s86
    %p88 = scmp.eq.s32.totalorder %s87, 0
    %s90 = sadd.s32 %s89, 1
    %s91 = scalar_select %p88, %s89, %s90
    %p94 = pneg %p88
    %p95 = scmp.eq.s32.totalorder %s9, 1
    %p96 = por %p94, %p95
    %p97 = scmp.ne.s32.totalorder %s89, %s92
    %p98 = scmp.eq.s32.totalorder %s9, 0
    %p99 = por %p97, %p98
    %p100 = scmp.ne.s32.totalorder %s89, %s92
    %p101 = scmp.eq.s32.totalorder %s14, 1
    %p102 = por %p100, %p101
    %p103 = scmp.ne.s32.totalorder %s92, %s93
    %p104 = scmp.eq.s32.totalorder %s14, 0
    %p105 = por %p103, %p104
    %p106 = scmp.ne.s32.totalorder %s92, %s93
    %p107 = scmp.eq.s32.totalorder %s15, 1
    %p108 = por %p106, %p107
    %p110 = scmp.ne.s32.totalorder %s93, %s109
    %p111 = scmp.eq.s32.totalorder %s15, 0
    %p112 = por %p110, %p111
    %p113 = scmp.le.s32.totalorder 1, %s9
    %p114 = scmp.lt.s32.totalorder %s9, 3
    %p115 = pnand %p113, %p114
    %p116 = pneg %p115
    // Predicated region
    $region9: #{tpu_custom_call.1} parent=5 // pred_check
      _
    $region10: #{tpu_custom_call.1} parent=5 // pred_check_branch
      %118 = sbr.rel (%p115) target = $region12
    $region11: #{tpu_custom_call.1} parent=5 // pred_region
      %s119 = ssub.s32 %s9, 1
    $region12: #{tpu_custom_call.1} parent=5 // pred_fallthru
      _
    %p120 = scmp.lt.s32.totalorder %s9, 2
    // Predicated region
    $region13: #{tpu_custom_call.1} parent=5 // pred_check
      %p121 = pneg %p120
    $region14: #{tpu_custom_call.1} parent=5 // pred_check_branch
      %123 = sbr.rel (%p121) target = $region16
    $region15: #{tpu_custom_call.1} parent=5 // pred_region
      // Predicated region
      $region17: #{tpu_custom_call.1} parent=15 // pred_check
        %p124 = pneg %p43
      $region18: #{tpu_custom_call.1} parent=15 // pred_check_branch
        %126 = sbr.rel (%p124) target = $region20
      $region19: #{tpu_custom_call.1} parent=15 // pred_region
        %p127 = scmp.lt.s32.totalorder %s16, 1
        %s128 = scalar_select %p127, %s16, 1
        %p129 = scmp.lt.s32.totalorder %s17, 0
        %s130 = scalar_select %p129, %s17, 0
        %s131 = smul.addr %s128, 4
        %s132 = sadd.s32 %s130, %s131
        %s133 = smul.addr %s132, 8
        %s134 = scalar_lea.vmem %s0, %s133
      $region20: #{tpu_custom_call.1} parent=15 // pred_fallthru
        _
    $region16: #{tpu_custom_call.1} parent=5 // pred_fallthru
      _
    %p135 = scmp.le.s32.totalorder 1, %s9
    %p136 = scmp.lt.s32.totalorder %s9, 3
    %p137 = pnand %p135, %p136
    %p138 = pneg %p137
    // Predicated region
    $region21: #{tpu_custom_call.1} parent=5 // pred_check
      _
    $region22: #{tpu_custom_call.1} parent=5 // pred_check_branch
      %140 = sbr.rel (%p137) target = $region24
    $region23: #{tpu_custom_call.1} parent=5 // pred_region
      %s141 = ssub.s32 %s9, 1
      %p142 = scmp.lt.s32.totalorder %s18, 1
      %s143 = scalar_select %p142, %s18, 1
      %p144 = scmp.lt.s32.totalorder %s19, 0
      %s145 = scalar_select %p144, %s19, 0
      %s146 = smul.addr %s143, 4
      %s147 = sadd.s32 %s145, %s146
      %s148 = smul.addr %s147, 8
      %s149 = scalar_lea.vmem %s0, %s148
      %p150 = pneg %p49
      %p151 = pneg %p46
      %p152 = pneg %p77
      %p153 = pneg %p74
      %p154 = scmp.lt.s32.totalorder %s18, 1
      %s155 = scalar_select %p154, %s18, 1
      %p156 = scmp.lt.s32.totalorder %s19, 0
      %s157 = scalar_select %p156, %s19, 0
      %s158 = smul.addr %s155, 4
      %s159 = sadd.s32 %s157, %s158
      %s160 = smul.addr %s159, 8
      %s161 = scalar_lea.vmem %s1, %s160
      %p162 = pneg %p105
      %p163 = pneg %p102
      %p164 = scmp.lt.s32.totalorder %s18, 1
      %s165 = scalar_select %p164, %s18, 1
      %p166 = scmp.lt.s32.totalorder %s19, 0
      %s167 = scalar_select %p166, %s19, 0
      %s168 = smul.addr %s165, 4
      %s169 = sadd.s32 %s167, %s168
      %s170 = smul.addr %s169, 8
      %s171 = scalar_lea.vmem %s2, %s170
      %p172 = scmp.lt.s32.totalorder %s18, 1
      %s173 = scalar_select %p172, %s18, 1
      %p174 = scmp.lt.s32.totalorder %s19, 0
      %s175 = scalar_select %p174, %s19, 0
      %s176 = smul.addr %s173, 4
      %s177 = sadd.s32 %s175, %s176
      %s178 = smul.addr %s177, 8
      %s179 = scalar_lea.vmem %s0, %s178
      %p180 = scmp.lt.s32.totalorder %s18, 1
      %s181 = scalar_select %p180, %s18, 1
      %p182 = scmp.lt.s32.totalorder %s19, 0
      %s183 = scalar_select %p182, %s19, 0
      %s184 = smul.addr %s181, 4
      %s185 = sadd.s32 %s183, %s184
      %s186 = smul.addr %s185, 8
      %s187 = scalar_lea.vmem %s1, %s186
      %p188 = scmp.lt.s32.totalorder %s18, 1
      %s189 = scalar_select %p188, %s18, 1
      %p190 = scmp.lt.s32.totalorder %s19, 0
      %s191 = scalar_select %p190, %s19, 0
      %s192 = smul.addr %s189, 4
      %s193 = sadd.s32 %s191, %s192
      %s194 = smul.addr %s193, 8
      %s195 = scalar_lea.vmem %s2, %s194
      %v196 = vld [vmem:[%s179] sm:$0xff]
      %v197 = vld [vmem:[%s179 + $0x8] sm:$0xff]
      %v198 = vld [vmem:[%s179 + $0x10] sm:$0xff]
      %v199 = vld [vmem:[%s179 + $0x18] sm:$0xf]
      %v200 = vld [vmem:[%s179 + $0x1] sm:$0xff]
      %v201 = vld [vmem:[%s179 + $0x9] sm:$0xff]
      %v202 = vld [vmem:[%s179 + $0x11] sm:$0xff]
      %v203 = vld [vmem:[%s179 + $0x19] sm:$0xf]
      %v204 = vadd.f32 %v196, %v200
      %v205 = vadd.f32 %v197, %v201
      %v206 = vadd.f32 %v198, %v202
      %v207 = vadd.f32 %v199, %v203
      %v208 = vld [vmem:[%s179 + $0x2] sm:$0xff]
      %v209 = vld [vmem:[%s179 + $0xa] sm:$0xff]
      %v210 = vld [vmem:[%s179 + $0x12] sm:$0xff]
      %v211 = vld [vmem:[%s179 + $0x1a] sm:$0xf]
      %v212 = vadd.f32 %v204, %v208
      %v213 = vadd.f32 %v205, %v209
      %v214 = vadd.f32 %v206, %v210
      %v215 = vadd.f32 %v207, %v211
      %v216 = vld [vmem:[%s179 + $0x3] sm:$0xff]
      %v217 = vld [vmem:[%s179 + $0xb] sm:$0xff]
      %v218 = vld [vmem:[%s179 + $0x13] sm:$0xff]
      %v219 = vld [vmem:[%s179 + $0x1b] sm:$0xf]
      %v220 = vadd.f32 %v212, %v216
      %v221 = vadd.f32 %v213, %v217
      %v222 = vadd.f32 %v214, %v218
      %v223 = vadd.f32 %v215, %v219
      %v224 = vld [vmem:[%s179 + $0x4] sm:$0xff]
      %v225 = vld [vmem:[%s179 + $0xc] sm:$0xff]
      %v226 = vld [vmem:[%s179 + $0x14] sm:$0xff]
      %v227 = vld [vmem:[%s179 + $0x1c] sm:$0xf]
      %v228 = vadd.f32 %v220, %v224
      %v229 = vadd.f32 %v221, %v225
      %v230 = vadd.f32 %v222, %v226
      %v231 = vadd.f32 %v223, %v227
      %vm232 = vcmask 64512
      %233 = vst.msk [vmem:[#allocation2] sm:$0xff] %vm232, %v228
      %234 = vst.msk [vmem:[#allocation2 + $0x8] sm:$0xff] %vm232, %v229
      %235 = vst.msk [vmem:[#allocation2 + $0x10] sm:$0xff] %vm232, %v230
      %vm236 = vcmask 60416
      %237 = vst.msk [vmem:[#allocation2 + $0x18] sm:$0xf] %vm236, %v231
      %v238 = vld [vmem:[#allocation2 + $0x4] sm:$0xf]
      %v239 = vld [vmem:[#allocation2 + $0x9] sm:$0xf]
      %v240 = vadd.f32 %v238, %v239
      %v241 = vld [vmem:[#allocation2 + $0xe] sm:$0xf]
      %v242 = vadd.f32 %v240, %v241
      %v243 = vld [vmem:[#allocation2 + $0x13] sm:$0xf]
      %v244 = vadd.f32 %v242, %v243
      %v245 = vld [vmem:[#allocation2 + $0x18] sm:$0xf]
      %v246 = vadd.f32 %v244, %v245
      %v247 = vmul.f32 %v246, 0.04
      %v248 = vld [vmem:[%s179 + $0x10] sm:$0xf]
      %249 = vst.msk [vmem:[%s195 + $0x10] sm:$0xf] %vm236, %v247
      %v250 = vsub.f32 %v248, %v247
      %251 = vst.msk [vmem:[%s187 + $0x10] sm:$0xf] %vm236, %v250
      %v252 = vld [vmem:[%s179] sm:$0xff]
      %v253 = vld [vmem:[%s179 + $0x8] sm:$0x1f]
      %v254 = vsel %vm232, %v252, 0.0
      %vm255 = vcmask 61440
      %v256 = vsel %vm255, %v253, 0.0
      %v257 = vadd.f32 %v254, %v256
      %v258 = vrot.slane %v257, 4
      %v259 = vadd.f32 %v257, %v258
      %v260 = vrot.slane %v259, 2
      %v261 = vadd.f32 %v259, %v260
      %v262 = vrot.slane %v261, 1
      %v263 = vadd.f32 %v261, %v262
      %v264 = vld [vmem:[%s179] sm:$0x1]
      %v265 = vmul.f32 %v264, 12.0
      %v266 = vadd.f32 %v263, %v265
      %v267 = vmul.f32 %v266, 0.04
      %vm268 = vcmask 57344
      %269 = vst.msk [vmem:[%s195] sm:$0x1] %vm268, %v267
      %v270 = vsub.f32 %v264, %v267
      %271 = vst.msk [vmem:[%s187] sm:$0x1] %vm268, %v270
      %v272 = vld [vmem:[%s179] sm:$0xff]
      %v273 = vld [vmem:[%s179 + $0x8] sm:$0x3f]
      %v274 = vsel %vm232, %v272, 0.0
      %vm275 = vcmask 62464
      %v276 = vsel %vm275, %v273, 0.0
      %v277 = vadd.f32 %v274, %v276
      %v278 = vrot.slane %v277, 4
      %v279 = vadd.f32 %v277, %v278
      %v280 = vrot.slane %v279, 2
      %v281 = vadd.f32 %v279, %v280
      %v282 = vrot.slane %v281, 1
      %v283 = vadd.f32 %v281, %v282
      %v284 = vld [vmem:[%s179] sm:$0x1]
      %v285 = vmul.f32 %v284, 11.0
      %v286 = vadd.f32 %v283, %v285
      %v287 = vmul.f32 %v286, 0.04
      %v288 = vld [vmem:[%s179 + $0x1] sm:$0x1]
      %289 = vst.msk [vmem:[%s195 + $0x1] sm:$0x1] %vm268, %v287
      %v290 = vsub.f32 %v288, %v287
      %291 = vst.msk [vmem:[%s187 + $0x1] sm:$0x1] %vm268, %v290
      %v292 = vld [vmem:[%s179] sm:$0xff]
      %v293 = vld [vmem:[%s179 + $0x8] sm:$0x7f]
      %v294 = vsel %vm232, %v292, 0.0
      %vm295 = vcmask 63488
      %v296 = vsel %vm295, %v293, 0.0
      %v297 = vadd.f32 %v294, %v296
      %v298 = vrot.slane %v297, 4
      %v299 = vadd.f32 %v297, %v298
      %v300 = vrot.slane %v299, 2
      %v301 = vadd.f32 %v299, %v300
      %v302 = vrot.slane %v301, 1
      %v303 = vadd.f32 %v301, %v302
      %v304 = vld [vmem:[%s179] sm:$0x1]
      %v305 = vmul.f32 %v304, 10.0
      %v306 = vadd.f32 %v303, %v305
      %v307 = vmul.f32 %v306, 0.04
      %v308 = vld [vmem:[%s179 + $0x2] sm:$0x1]
      %309 = vst.msk [vmem:[%s195 + $0x2] sm:$0x1] %vm268, %v307
      %v310 = vsub.f32 %v308, %v307
      %311 = vst.msk [vmem:[%s187 + $0x2] sm:$0x1] %vm268, %v310
      %v312 = vld [vmem:[%s179] sm:$0xff]
      %v313 = vld [vmem:[%s179 + $0x8] sm:$0xff]
      %v314 = vsel %vm232, %v312, 0.0
      %v315 = vsel %vm232, %v313, 0.0
      %v316 = vadd.f32 %v314, %v315
      %v317 = vrot.slane %v316, 4
      %v318 = vadd.f32 %v316, %v317
      %v319 = vrot.slane %v318, 2
      %v320 = vadd.f32 %v318, %v319
      %v321 = vrot.slane %v320, 1
      %v322 = vadd.f32 %v320, %v321
      %v323 = vld [vmem:[%s179] sm:$0x1]
      %v324 = vmul.f32 %v323, 9.0
      %v325 = vadd.f32 %v322, %v324
      %v326 = vmul.f32 %v325, 0.04
      %v327 = vld [vmem:[%s179 + $0x3] sm:$0x1]
      %328 = vst.msk [vmem:[%s195 + $0x3] sm:$0x1] %vm268, %v326
      %v329 = vsub.f32 %v327, %v326
      %330 = vst.msk [vmem:[%s187 + $0x3] sm:$0x1] %vm268, %v329
      %v331 = vld [vmem:[%s179] sm:$0xff]
      %v332 = vld [vmem:[%s179 + $0x8] sm:$0xff]
      %v333 = vld [vmem:[%s179 + $0x10] sm:$0x1]
      %v334 = vsel %vm232, %v331, 0.0
      %v335 = vsel %vm232, %v332, 0.0
      %v336 = vadd.f32 %v334, %v335
      %v337 = vsel %vm268, %v333, 0.0
      %v338 = vadd.f32 %v336, %v337
      %v339 = vrot.slane %v338, 4
      %v340 = vadd.f32 %v338, %v339
      %v341 = vrot.slane %v340, 2
      %v342 = vadd.f32 %v340, %v341
      %v343 = vrot.slane %v342, 1
      %v344 = vadd.f32 %v342, %v343
      %v345 = vld [vmem:[%s179] sm:$0x1]
      %v346 = vmul.f32 %v345, 8.0
      %v347 = vadd.f32 %v344, %v346
      %v348 = vmul.f32 %v347, 0.04
      %v349 = vld [vmem:[%s179 + $0x4] sm:$0x1]
      %350 = vst.msk [vmem:[%s195 + $0x4] sm:$0x1] %vm268, %v348
      %v351 = vsub.f32 %v349, %v348
      %352 = vst.msk [vmem:[%s187 + $0x4] sm:$0x1] %vm268, %v351
      %v353 = vld [vmem:[%s179] sm:$0xff]
      %v354 = vld [vmem:[%s179 + $0x8] sm:$0xff]
      %v355 = vld [vmem:[%s179 + $0x10] sm:$0x3]
      %v356 = vsel %vm232, %v353, 0.0
      %v357 = vsel %vm232, %v354, 0.0
      %v358 = vadd.f32 %v356, %v357
      %vm359 = vcmask 58368
      %v360 = vsel %vm359, %v355, 0.0
      %v361 = vadd.f32 %v358, %v360
      %v362 = vrot.slane %v361, 4
      %v363 = vadd.f32 %v361, %v362
      %v364 = vrot.slane %v363, 2
      %v365 = vadd.f32 %v363, %v364
      %v366 = vrot.slane %v365, 1
      %v367 = vadd.f32 %v365, %v366
      %v368 = vld [vmem:[%s179] sm:$0x1]
      %v369 = vmul.f32 %v368, 7.0
      %v370 = vadd.f32 %v367, %v369
      %v371 = vmul.f32 %v370, 0.04
      %v372 = vld [vmem:[%s179 + $0x5] sm:$0x1]
      %373 = vst.msk [vmem:[%s195 + $0x5] sm:$0x1] %vm268, %v371
      %v374 = vsub.f32 %v372, %v371
      %375 = vst.msk [vmem:[%s187 + $0x5] sm:$0x1] %vm268, %v374
      %v376 = vld [vmem:[%s179] sm:$0xff]
      %v377 = vld [vmem:[%s179 + $0x8] sm:$0xff]
      %v378 = vld [vmem:[%s179 + $0x10] sm:$0x7]
      %v379 = vsel %vm232, %v376, 0.0
      %v380 = vsel %vm232, %v377, 0.0
      %v381 = vadd.f32 %v379, %v380
      %vm382 = vcmask 59392
      %v383 = vsel %vm382, %v378, 0.0
      %v384 = vadd.f32 %v381, %v383
      %v385 = vrot.slane %v384, 4
      %v386 = vadd.f32 %v384, %v385
      %v387 = vrot.slane %v386, 2
      %v388 = vadd.f32 %v386, %v387
      %v389 = vrot.slane %v388, 1
      %v390 = vadd.f32 %v388, %v389
      %v391 = vld [vmem:[%s179] sm:$0x1]
      %v392 = vmul.f32 %v391, 6.0
      %v393 = vadd.f32 %v390, %v392
      %v394 = vmul.f32 %v393, 0.04
      %v395 = vld [vmem:[%s179 + $0x6] sm:$0x1]
      %396 = vst.msk [vmem:[%s195 + $0x6] sm:$0x1] %vm268, %v394
      %v397 = vsub.f32 %v395, %v394
      %398 = vst.msk [vmem:[%s187 + $0x6] sm:$0x1] %vm268, %v397
      %v399 = vld [vmem:[%s179] sm:$0xff]
      %v400 = vld [vmem:[%s179 + $0x8] sm:$0xff]
      %v401 = vld [vmem:[%s179 + $0x10] sm:$0xf]
      %v402 = vsel %vm232, %v399, 0.0
      %v403 = vsel %vm232, %v400, 0.0
      %v404 = vadd.f32 %v402, %v403
      %v405 = vsel %vm236, %v401, 0.0
      %v406 = vadd.f32 %v404, %v405
      %v407 = vrot.slane %v406, 4
      %v408 = vadd.f32 %v406, %v407
      %v409 = vrot.slane %v408, 2
      %v410 = vadd.f32 %v408, %v409
      %v411 = vrot.slane %v410, 1
      %v412 = vadd.f32 %v410, %v411
      %v413 = vld [vmem:[%s179] sm:$0x1]
      %v414 = vmul.f32 %v413, 5.0
      %v415 = vadd.f32 %v412, %v414
      %v416 = vmul.f32 %v415, 0.04
      %v417 = vld [vmem:[%s179 + $0x7] sm:$0x1]
      %418 = vst.msk [vmem:[%s195 + $0x7] sm:$0x1] %vm268, %v416
      %v419 = vsub.f32 %v417, %v416
      %420 = vst.msk [vmem:[%s187 + $0x7] sm:$0x1] %vm268, %v419
      %v421 = vld [vmem:[%s179] sm:$0xff]
      %v422 = vld [vmem:[%s179 + $0x8] sm:$0xff]
      %v423 = vld [vmem:[%s179 + $0x10] sm:$0x1f]
      %v424 = vsel %vm232, %v421, 0.0
      %v425 = vsel %vm232, %v422, 0.0
      %v426 = vadd.f32 %v424, %v425
      %v427 = vsel %vm255, %v423, 0.0
      %v428 = vadd.f32 %v426, %v427
      %v429 = vrot.slane %v428, 4
      %v430 = vadd.f32 %v428, %v429
      %v431 = vrot.slane %v430, 2
      %v432 = vadd.f32 %v430, %v431
      %v433 = vrot.slane %v432, 1
      %v434 = vadd.f32 %v432, %v433
      %v435 = vld [vmem:[%s179] sm:$0x1]
      %v436 = vmul.f32 %v435, 4.0
      %v437 = vadd.f32 %v434, %v436
      %v438 = vmul.f32 %v437, 0.04
      %v439 = vld [vmem:[%s179 + $0x8] sm:$0x1]
      %440 = vst.msk [vmem:[%s195 + $0x8] sm:$0x1] %vm268, %v438
      %v441 = vsub.f32 %v439, %v438
      %442 = vst.msk [vmem:[%s187 + $0x8] sm:$0x1] %vm268, %v441
      %v443 = vld [vmem:[%s179] sm:$0xff]
      %v444 = vld [vmem:[%s179 + $0x8] sm:$0xff]
      %v445 = vld [vmem:[%s179 + $0x10] sm:$0x3f]
      %v446 = vsel %vm232, %v443, 0.0
      %v447 = vsel %vm232, %v444, 0.0
      %v448 = vadd.f32 %v446, %v447
      %v449 = vsel %vm275, %v445, 0.0
      %v450 = vadd.f32 %v448, %v449
      %v451 = vrot.slane %v450, 4
      %v452 = vadd.f32 %v450, %v451
      %v453 = vrot.slane %v452, 2
      %v454 = vadd.f32 %v452, %v453
      %v455 = vrot.slane %v454, 1
      %v456 = vadd.f32 %v454, %v455
      %v457 = vld [vmem:[%s179] sm:$0x1]
      %v458 = vmul.f32 %v457, 3.0
      %v459 = vadd.f32 %v456, %v458
      %v460 = vmul.f32 %v459, 0.04
      %v461 = vld [vmem:[%s179 + $0x9] sm:$0x1]
      %462 = vst.msk [vmem:[%s195 + $0x9] sm:$0x1] %vm268, %v460
      %v463 = vsub.f32 %v461, %v460
      %464 = vst.msk [vmem:[%s187 + $0x9] sm:$0x1] %vm268, %v463
      %v465 = vld [vmem:[%s179] sm:$0xff]
      %v466 = vld [vmem:[%s179 + $0x8] sm:$0xff]
      %v467 = vld [vmem:[%s179 + $0x10] sm:$0x7f]
      %v468 = vsel %vm232, %v465, 0.0
      %v469 = vsel %vm232, %v466, 0.0
      %v470 = vadd.f32 %v468, %v469
      %v471 = vsel %vm295, %v467, 0.0
      %v472 = vadd.f32 %v470, %v471
      %v473 = vrot.slane %v472, 4
      %v474 = vadd.f32 %v472, %v473
      %v475 = vrot.slane %v474, 2
      %v476 = vadd.f32 %v474, %v475
      %v477 = vrot.slane %v476, 1
      %v478 = vadd.f32 %v476, %v477
      %v479 = vld [vmem:[%s179] sm:$0x1]
      %v480 = vmul.f32 %v479, 2.0
      %v481 = vadd.f32 %v478, %v480
      %v482 = vmul.f32 %v481, 0.04
      %v483 = vld [vmem:[%s179 + $0xa] sm:$0x1]
      %484 = vst.msk [vmem:[%s195 + $0xa] sm:$0x1] %vm268, %v482
      %v485 = vsub.f32 %v483, %v482
      %486 = vst.msk [vmem:[%s187 + $0xa] sm:$0x1] %vm268, %v485
      %v487 = vld [vmem:[%s179] sm:$0xff]
      %v488 = vld [vmem:[%s179 + $0x8] sm:$0xff]
      %v489 = vld [vmem:[%s179 + $0x10] sm:$0xff]
      %v490 = vsel %vm232, %v487, 0.0
      %v491 = vsel %vm232, %v488, 0.0
      %v492 = vadd.f32 %v490, %v491
      %v493 = vsel %vm232, %v489, 0.0
      %v494 = vadd.f32 %v492, %v493
      %v495 = vrot.slane %v494, 4
      %v496 = vadd.f32 %v494, %v495
      %v497 = vrot.slane %v496, 2
      %v498 = vadd.f32 %v496, %v497
      %v499 = vrot.slane %v498, 1
      %v500 = vadd.f32 %v498, %v499
      %v501 = vld [vmem:[%s179] sm:$0x1]
      %v502 = vadd.f32 %v500, %v501
      %v503 = vmul.f32 %v502, 0.04
      %v504 = vld [vmem:[%s179 + $0xb] sm:$0x1]
      %505 = vst.msk [vmem:[%s195 + $0xb] sm:$0x1] %vm268, %v503
      %v506 = vsub.f32 %v504, %v503
      %507 = vst.msk [vmem:[%s187 + $0xb] sm:$0x1] %vm268, %v506
      %v508 = vld [vmem:[%s179] sm:$0xff]
      %v509 = vld [vmem:[%s179 + $0x8] sm:$0xff]
      %v510 = vld [vmem:[%s179 + $0x10] sm:$0xff]
      %v511 = vld [vmem:[%s179 + $0x18] sm:$0x1]
      %v512 = vsel %vm232, %v508, 0.0
      %v513 = vsel %vm232, %v509, 0.0
      %v514 = vadd.f32 %v512, %v513
      %v515 = vsel %vm232, %v510, 0.0
      %v516 = vadd.f32 %v514, %v515
      %v517 = vsel %vm268, %v511, 0.0
      %v518 = vadd.f32 %v516, %v517
      %v519 = vrot.slane %v518, 4
      %v520 = vadd.f32 %v518, %v519
      %v521 = vrot.slane %v520, 2
      %v522 = vadd.f32 %v520, %v521
      %v523 = vrot.slane %v522, 1
      %v524 = vadd.f32 %v522, %v523
      %v525 = vmul.f32 %v524, 0.04
      %v526 = vld [vmem:[%s179 + $0xc] sm:$0x1]
      %527 = vst.msk [vmem:[%s195 + $0xc] sm:$0x1] %vm268, %v525
      %v528 = vsub.f32 %v526, %v525
      %529 = vst.msk [vmem:[%s187 + $0xc] sm:$0x1] %vm268, %v528
      %v530 = vld [vmem:[%s179 + $0x1] sm:$0xff]
      %v531 = vld [vmem:[%s179 + $0x9] sm:$0xff]
      %v532 = vld [vmem:[%s179 + $0x11] sm:$0xff]
      %v533 = vld [vmem:[%s179 + $0x19] sm:$0x1]
      %v534 = vsel %vm232, %v530, 0.0
      %v535 = vsel %vm232, %v531, 0.0
      %v536 = vadd.f32 %v534, %v535
      %v537 = vsel %vm232, %v532, 0.0
      %v538 = vadd.f32 %v536, %v537
      %v539 = vsel %vm268, %v533, 0.0
      %v540 = vadd.f32 %v538, %v539
      %v541 = vrot.slane %v540, 4
      %v542 = vadd.f32 %v540, %v541
      %v543 = vrot.slane %v542, 2
      %v544 = vadd.f32 %v542, %v543
      %v545 = vrot.slane %v544, 1
      %v546 = vadd.f32 %v544, %v545
      %v547 = vmul.f32 %v546, 0.04
      %v548 = vld [vmem:[%s179 + $0xd] sm:$0x1]
      %549 = vst.msk [vmem:[%s195 + $0xd] sm:$0x1] %vm268, %v547
      %v550 = vsub.f32 %v548, %v547
      %551 = vst.msk [vmem:[%s187 + $0xd] sm:$0x1] %vm268, %v550
      %v552 = vld [vmem:[%s179 + $0x2] sm:$0xff]
      %v553 = vld [vmem:[%s179 + $0xa] sm:$0xff]
      %v554 = vld [vmem:[%s179 + $0x12] sm:$0xff]
      %v555 = vld [vmem:[%s179 + $0x1a] sm:$0x1]
      %v556 = vsel %vm232, %v552, 0.0
      %v557 = vsel %vm232, %v553, 0.0
      %v558 = vadd.f32 %v556, %v557
      %v559 = vsel %vm232, %v554, 0.0
      %v560 = vadd.f32 %v558, %v559
      %v561 = vsel %vm268, %v555, 0.0
      %v562 = vadd.f32 %v560, %v561
      %v563 = vrot.slane %v562, 4
      %v564 = vadd.f32 %v562, %v563
      %v565 = vrot.slane %v564, 2
      %v566 = vadd.f32 %v564, %v565
      %v567 = vrot.slane %v566, 1
      %v568 = vadd.f32 %v566, %v567
      %v569 = vmul.f32 %v568, 0.04
      %v570 = vld [vmem:[%s179 + $0xe] sm:$0x1]
      %571 = vst.msk [vmem:[%s195 + $0xe] sm:$0x1] %vm268, %v569
      %v572 = vsub.f32 %v570, %v569
      %573 = vst.msk [vmem:[%s187 + $0xe] sm:$0x1] %vm268, %v572
      %v574 = vld [vmem:[%s179 + $0x3] sm:$0xff]
      %v575 = vld [vmem:[%s179 + $0xb] sm:$0xff]
      %v576 = vld [vmem:[%s179 + $0x13] sm:$0xff]
      %v577 = vld [vmem:[%s179 + $0x1b] sm:$0x1]
      %v578 = vsel %vm232, %v574, 0.0
      %v579 = vsel %vm232, %v575, 0.0
      %v580 = vadd.f32 %v578, %v579
      %v581 = vsel %vm232, %v576, 0.0
      %v582 = vadd.f32 %v580, %v581
      %v583 = vsel %vm268, %v577, 0.0
      %v584 = vadd.f32 %v582, %v583
      %v585 = vrot.slane %v584, 4
      %v586 = vadd.f32 %v584, %v585
      %v587 = vrot.slane %v586, 2
      %v588 = vadd.f32 %v586, %v587
      %v589 = vrot.slane %v588, 1
      %v590 = vadd.f32 %v588, %v589
      %v591 = vmul.f32 %v590, 0.04
      %v592 = vld [vmem:[%s179 + $0xf] sm:$0x1]
      %593 = vst.msk [vmem:[%s195 + $0xf] sm:$0x1] %vm268, %v591
      %v594 = vsub.f32 %v592, %v591
      %595 = vst.msk [vmem:[%s187 + $0xf] sm:$0x1] %vm268, %v594
      %v596 = vld [vmem:[%s179 + $0x8] sm:$0xff]
      %v597 = vld [vmem:[%s179 + $0x10] sm:$0xff]
      %v598 = vld [vmem:[%s179 + $0x18] sm:$0xff]
      %v599 = vsel %vm232, %v596, 0.0
      %v600 = vsel %vm232, %v597, 0.0
      %v601 = vadd.f32 %v599, %v600
      %v602 = vsel %vm232, %v598, 0.0
      %v603 = vadd.f32 %v601, %v602
      %v604 = vrot.slane %v603, 4
      %v605 = vadd.f32 %v603, %v604
      %v606 = vrot.slane %v605, 2
      %v607 = vadd.f32 %v605, %v606
      %v608 = vrot.slane %v607, 1
      %v609 = vadd.f32 %v607, %v608
      %v610 = vld [vmem:[%s179 + $0x1f] sm:$0x1]
      %v611 = vadd.f32 %v609, %v610
      %v612 = vmul.f32 %v611, 0.04
      %v613 = vld [vmem:[%s179 + $0x14] sm:$0x1]
      %614 = vst.msk [vmem:[%s195 + $0x14] sm:$0x1] %vm268, %v612
      %v615 = vsub.f32 %v613, %v612
      %616 = vst.msk [vmem:[%s187 + $0x14] sm:$0x1] %vm268, %v615
      %v617 = vld [vmem:[%s179 + $0x9] sm:$0xff]
      %v618 = vld [vmem:[%s179 + $0x11] sm:$0xff]
      %v619 = vld [vmem:[%s179 + $0x19] sm:$0x7f]
      %v620 = vsel %vm232, %v617, 0.0
      %v621 = vsel %vm232, %v618, 0.0
      %v622 = vadd.f32 %v620, %v621
      %v623 = vsel %vm295, %v619, 0.0
      %v624 = vadd.f32 %v622, %v623
      %v625 = vrot.slane %v624, 4
      %v626 = vadd.f32 %v624, %v625
      %v627 = vrot.slane %v626, 2
      %v628 = vadd.f32 %v626, %v627
      %v629 = vrot.slane %v628, 1
      %v630 = vadd.f32 %v628, %v629
      %v631 = vld [vmem:[%s179 + $0x1f] sm:$0x1]
      %v632 = vmul.f32 %v631, 2.0
      %v633 = vadd.f32 %v630, %v632
      %v634 = vmul.f32 %v633, 0.04
      %v635 = vld [vmem:[%s179 + $0x15] sm:$0x1]
      %636 = vst.msk [vmem:[%s195 + $0x15] sm:$0x1] %vm268, %v634
      %v637 = vsub.f32 %v635, %v634
      %638 = vst.msk [vmem:[%s187 + $0x15] sm:$0x1] %vm268, %v637
      %v639 = vld [vmem:[%s179 + $0xa] sm:$0xff]
      %v640 = vld [vmem:[%s179 + $0x12] sm:$0xff]
      %v641 = vld [vmem:[%s179 + $0x1a] sm:$0x3f]
      %v642 = vsel %vm232, %v639, 0.0
      %v643 = vsel %vm232, %v640, 0.0
      %v644 = vadd.f32 %v642, %v643
      %v645 = vsel %vm275, %v641, 0.0
      %v646 = vadd.f32 %v644, %v645
      %v647 = vrot.slane %v646, 4
      %v648 = vadd.f32 %v646, %v647
      %v649 = vrot.slane %v648, 2
      %v650 = vadd.f32 %v648, %v649
      %v651 = vrot.slane %v650, 1
      %v652 = vadd.f32 %v650, %v651
      %v653 = vld [vmem:[%s179 + $0x1f] sm:$0x1]
      %v654 = vmul.f32 %v653, 3.0
      %v655 = vadd.f32 %v652, %v654
      %v656 = vmul.f32 %v655, 0.04
      %v657 = vld [vmem:[%s179 + $0x16] sm:$0x1]
      %658 = vst.msk [vmem:[%s195 + $0x16] sm:$0x1] %vm268, %v656
      %v659 = vsub.f32 %v657, %v656
      %660 = vst.msk [vmem:[%s187 + $0x16] sm:$0x1] %vm268, %v659
      %v661 = vld [vmem:[%s179 + $0xb] sm:$0xff]
      %v662 = vld [vmem:[%s179 + $0x13] sm:$0xff]
      %v663 = vld [vmem:[%s179 + $0x1b] sm:$0x1f]
      %v664 = vsel %vm232, %v661, 0.0
      %v665 = vsel %vm232, %v662, 0.0
      %v666 = vadd.f32 %v664, %v665
      %v667 = vsel %vm255, %v663, 0.0
      %v668 = vadd.f32 %v666, %v667
      %v669 = vrot.slane %v668, 4
      %v670 = vadd.f32 %v668, %v669
      %v671 = vrot.slane %v670, 2
      %v672 = vadd.f32 %v670, %v671
      %v673 = vrot.slane %v672, 1
      %v674 = vadd.f32 %v672, %v673
      %v675 = vld [vmem:[%s179 + $0x1f] sm:$0x1]
      %v676 = vmul.f32 %v675, 4.0
      %v677 = vadd.f32 %v674, %v676
      %v678 = vmul.f32 %v677, 0.04
      %v679 = vld [vmem:[%s179 + $0x17] sm:$0x1]
      %680 = vst.msk [vmem:[%s195 + $0x17] sm:$0x1] %vm268, %v678
      %v681 = vsub.f32 %v679, %v678
      %682 = vst.msk [vmem:[%s187 + $0x17] sm:$0x1] %vm268, %v681
      %v683 = vld [vmem:[%s179 + $0xc] sm:$0xff]
      %v684 = vld [vmem:[%s179 + $0x14] sm:$0xff]
      %v685 = vld [vmem:[%s179 + $0x1c] sm:$0xf]
      %v686 = vsel %vm232, %v683, 0.0
      %v687 = vsel %vm232, %v684, 0.0
      %v688 = vadd.f32 %v686, %v687
      %v689 = vsel %vm236, %v685, 0.0
      %v690 = vadd.f32 %v688, %v689
      %v691 = vrot.slane %v690, 4
      %v692 = vadd.f32 %v690, %v691
      %v693 = vrot.slane %v692, 2
      %v694 = vadd.f32 %v692, %v693
      %v695 = vrot.slane %v694, 1
      %v696 = vadd.f32 %v694, %v695
      %v697 = vld [vmem:[%s179 + $0x1f] sm:$0x1]
      %v698 = vmul.f32 %v697, 5.0
      %v699 = vadd.f32 %v696, %v698
      %v700 = vmul.f32 %v699, 0.04
      %v701 = vld [vmem:[%s179 + $0x18] sm:$0x1]
      %702 = vst.msk [vmem:[%s195 + $0x18] sm:$0x1] %vm268, %v700
      %v703 = vsub.f32 %v701, %v700
      %704 = vst.msk [vmem:[%s187 + $0x18] sm:$0x1] %vm268, %v703
      %v705 = vld [vmem:[%s179 + $0xd] sm:$0xff]
      %v706 = vld [vmem:[%s179 + $0x15] sm:$0xff]
      %v707 = vld [vmem:[%s179 + $0x1d] sm:$0x7]
      %v708 = vsel %vm232, %v705, 0.0
      %v709 = vsel %vm232, %v706, 0.0
      %v710 = vadd.f32 %v708, %v709
      %v711 = vsel %vm382, %v707, 0.0
      %v712 = vadd.f32 %v710, %v711
      %v713 = vrot.slane %v712, 4
      %v714 = vadd.f32 %v712, %v713
      %v715 = vrot.slane %v714, 2
      %v716 = vadd.f32 %v714, %v715
      %v717 = vrot.slane %v716, 1
      %v718 = vadd.f32 %v716, %v717
      %v719 = vld [vmem:[%s179 + $0x1f] sm:$0x1]
      %v720 = vmul.f32 %v719, 6.0
      %v721 = vadd.f32 %v718, %v720
      %v722 = vmul.f32 %v721, 0.04
      %v723 = vld [vmem:[%s179 + $0x19] sm:$0x1]
      %724 = vst.msk [vmem:[%s195 + $0x19] sm:$0x1] %vm268, %v722
      %v725 = vsub.f32 %v723, %v722
      %726 = vst.msk [vmem:[%s187 + $0x19] sm:$0x1] %vm268, %v725
      %v727 = vld [vmem:[%s179 + $0xe] sm:$0xff]
      %v728 = vld [vmem:[%s179 + $0x16] sm:$0xff]
      %v729 = vld [vmem:[%s179 + $0x1e] sm:$0x3]
      %v730 = vsel %vm232, %v727, 0.0
      %v731 = vsel %vm232, %v728, 0.0
      %v732 = vadd.f32 %v730, %v731
      %v733 = vsel %vm359, %v729, 0.0
      %v734 = vadd.f32 %v732, %v733
      %v735 = vrot.slane %v734, 4
      %v736 = vadd.f32 %v734, %v735
      %v737 = vrot.slane %v736, 2
      %v738 = vadd.f32 %v736, %v737
      %v739 = vrot.slane %v738, 1
      %v740 = vadd.f32 %v738, %v739
      %v741 = vld [vmem:[%s179 + $0x1f] sm:$0x1]
      %v742 = vmul.f32 %v741, 7.0
      %v743 = vadd.f32 %v740, %v742
      %v744 = vmul.f32 %v743, 0.04
      %v745 = vld [vmem:[%s179 + $0x1a] sm:$0x1]
      %746 = vst.msk [vmem:[%s195 + $0x1a] sm:$0x1] %vm268, %v744
      %v747 = vsub.f32 %v745, %v744
      %748 = vst.msk [vmem:[%s187 + $0x1a] sm:$0x1] %vm268, %v747
      %v749 = vld [vmem:[%s179 + $0xf] sm:$0xff]
      %v750 = vld [vmem:[%s179 + $0x17] sm:$0xff]
      %v751 = vld [vmem:[%s179 + $0x1f] sm:$0x1]
      %v752 = vsel %vm232, %v749, 0.0
      %v753 = vsel %vm232, %v750, 0.0
      %v754 = vadd.f32 %v752, %v753
      %v755 = vsel %vm268, %v751, 0.0
      %v756 = vadd.f32 %v754, %v755
      %v757 = vrot.slane %v756, 4
      %v758 = vadd.f32 %v756, %v757
      %v759 = vrot.slane %v758, 2
      %v760 = vadd.f32 %v758, %v759
      %v761 = vrot.slane %v760, 1
      %v762 = vadd.f32 %v760, %v761
      %v763 = vmul.f32 %v751, 8.0
      %v764 = vadd.f32 %v762, %v763
      %v765 = vmul.f32 %v764, 0.04
      %v766 = vld [vmem:[%s179 + $0x1b] sm:$0x1]
      %767 = vst.msk [vmem:[%s195 + $0x1b] sm:$0x1] %vm268, %v765
      %v768 = vsub.f32 %v766, %v765
      %769 = vst.msk [vmem:[%s187 + $0x1b] sm:$0x1] %vm268, %v768
      %v770 = vld [vmem:[%s179 + $0x10] sm:$0xff]
      %v771 = vld [vmem:[%s179 + $0x18] sm:$0xff]
      %v772 = vsel %vm232, %v770, 0.0
      %v773 = vsel %vm232, %v771, 0.0
      %v774 = vadd.f32 %v772, %v773
      %v775 = vrot.slane %v774, 4
      %v776 = vadd.f32 %v774, %v775
      %v777 = vrot.slane %v776, 2
      %v778 = vadd.f32 %v776, %v777
      %v779 = vrot.slane %v778, 1
      %v780 = vadd.f32 %v778, %v779
      %v781 = vld [vmem:[%s179 + $0x1f] sm:$0x1]
      %v782 = vmul.f32 %v781, 9.0
      %v783 = vadd.f32 %v780, %v782
      %v784 = vmul.f32 %v783, 0.04
      %v785 = vld [vmem:[%s179 + $0x1c] sm:$0x1]
      %786 = vst.msk [vmem:[%s195 + $0x1c] sm:$0x1] %vm268, %v784
      %v787 = vsub.f32 %v785, %v784
      %788 = vst.msk [vmem:[%s187 + $0x1c] sm:$0x1] %vm268, %v787
      %v789 = vld [vmem:[%s179 + $0x11] sm:$0xff]
      %v790 = vld [vmem:[%s179 + $0x19] sm:$0x7f]
      %v791 = vsel %vm232, %v789, 0.0
      %v792 = vsel %vm295, %v790, 0.0
      %v793 = vadd.f32 %v791, %v792
      %v794 = vrot.slane %v793, 4
      %v795 = vadd.f32 %v793, %v794
      %v796 = vrot.slane %v795, 2
      %v797 = vadd.f32 %v795, %v796
      %v798 = vrot.slane %v797, 1
      %v799 = vadd.f32 %v797, %v798
      %v800 = vld [vmem:[%s179 + $0x1f] sm:$0x1]
      %v801 = vmul.f32 %v800, 10.0
      %v802 = vadd.f32 %v799, %v801
      %v803 = vmul.f32 %v802, 0.04
      %v804 = vld [vmem:[%s179 + $0x1d] sm:$0x1]
      %805 = vst.msk [vmem:[%s195 + $0x1d] sm:$0x1] %vm268, %v803
      %v806 = vsub.f32 %v804, %v803
      %807 = vst.msk [vmem:[%s187 + $0x1d] sm:$0x1] %vm268, %v806
      %v808 = vld [vmem:[%s179 + $0x12] sm:$0xff]
      %v809 = vld [vmem:[%s179 + $0x1a] sm:$0x3f]
      %v810 = vsel %vm232, %v808, 0.0
      %v811 = vsel %vm275, %v809, 0.0
      %v812 = vadd.f32 %v810, %v811
      %v813 = vrot.slane %v812, 4
      %v814 = vadd.f32 %v812, %v813
      %v815 = vrot.slane %v814, 2
      %v816 = vadd.f32 %v814, %v815
      %v817 = vrot.slane %v816, 1
      %v818 = vadd.f32 %v816, %v817
      %v819 = vld [vmem:[%s179 + $0x1f] sm:$0x1]
      %v820 = vmul.f32 %v819, 11.0
      %v821 = vadd.f32 %v818, %v820
      %v822 = vmul.f32 %v821, 0.04
      %v823 = vld [vmem:[%s179 + $0x1e] sm:$0x1]
      %824 = vst.msk [vmem:[%s195 + $0x1e] sm:$0x1] %vm268, %v822
      %v825 = vsub.f32 %v823, %v822
      %826 = vst.msk [vmem:[%s187 + $0x1e] sm:$0x1] %vm268, %v825
      %v827 = vld [vmem:[%s179 + $0x13] sm:$0xff]
      %v828 = vld [vmem:[%s179 + $0x1b] sm:$0x1f]
      %v829 = vsel %vm232, %v827, 0.0
      %v830 = vsel %vm255, %v828, 0.0
      %v831 = vadd.f32 %v829, %v830
      %v832 = vrot.slane %v831, 4
      %v833 = vadd.f32 %v831, %v832
      %v834 = vrot.slane %v833, 2
      %v835 = vadd.f32 %v833, %v834
      %v836 = vrot.slane %v835, 1
      %v837 = vadd.f32 %v835, %v836
      %v838 = vld [vmem:[%s179 + $0x1f] sm:$0x1]
      %v839 = vmul.f32 %v838, 12.0
      %v840 = vadd.f32 %v837, %v839
      %v841 = vmul.f32 %v840, 0.04
      %842 = vst.msk [vmem:[%s195 + $0x1f] sm:$0x1] %vm268, %v841
      %v843 = vsub.f32 %v838, %v841
      %844 = vst.msk [vmem:[%s187 + $0x1f] sm:$0x1] %vm268, %v843
      %p845 = scmp.lt.s32.totalorder %s18, 1
      %s846 = scalar_select %p845, %s18, 1
      %p847 = scmp.lt.s32.totalorder %s19, 0
      %s848 = scalar_select %p847, %s19, 0
      %s849 = smul.addr %s846, 4
      %s850 = sadd.s32 %s848, %s849
      %s851 = smul.addr %s850, 8
      %s852 = scalar_lea.vmem %s1, %s851
      %p853 = scmp.lt.s32.totalorder %s18, 1
      %s854 = scalar_select %p853, %s18, 1
      %p855 = scmp.lt.s32.totalorder %s19, 0
      %s856 = scalar_select %p855, %s19, 0
      %s857 = smul.addr %s854, 4
      %s858 = sadd.s32 %s856, %s857
      %s859 = smul.addr %s858, 8
      %s860 = scalar_lea.vmem %s2, %s859
      // Predicated region
      $region25: #{tpu_custom_call.1} parent=23 // pred_check
        %p861 = pneg %p74
      $region26: #{tpu_custom_call.1} parent=23 // pred_check_branch
        %863 = sbr.rel (%p861) target = $region28
      $region27: #{tpu_custom_call.1} parent=23 // pred_region
        _
      $region28: #{tpu_custom_call.1} parent=23 // pred_fallthru
        _
      // Predicated region
      $region29: #{tpu_custom_call.1} parent=23 // pred_check
        %p864 = pneg %p102
      $region30: #{tpu_custom_call.1} parent=23 // pred_check_branch
        %866 = sbr.rel (%p864) target = $region32
      $region31: #{tpu_custom_call.1} parent=23 // pred_region
        _
      $region32: #{tpu_custom_call.1} parent=23 // pred_fallthru
        _
    $region24: #{tpu_custom_call.1} parent=5 // pred_fallthru
      _
    %p867 = scmp.le.s32.totalorder 2, %s9
    // Predicated region
    $region33: #{tpu_custom_call.1} parent=5 // pred_check
      %p868 = pneg %p867
    $region34: #{tpu_custom_call.1} parent=5 // pred_check_branch
      %870 = sbr.rel (%p868) target = $region36
    $region35: #{tpu_custom_call.1} parent=5 // pred_region
      %s871 = ssub.s32 %s9, 2
      // Predicated region
      $region37: #{tpu_custom_call.1} parent=35 // pred_check
        %p872 = pneg %p80
      $region38: #{tpu_custom_call.1} parent=35 // pred_check_branch
        %874 = sbr.rel (%p872) target = $region40
      $region39: #{tpu_custom_call.1} parent=35 // pred_region
        %p875 = scmp.lt.s32.totalorder %s20, 1
        %s876 = scalar_select %p875, %s20, 1
        %p877 = scmp.lt.s32.totalorder %s21, 0
        %s878 = scalar_select %p877, %s21, 0
        %s879 = smul.addr %s876, 4
        %s880 = sadd.s32 %s878, %s879
        %s881 = smul.addr %s880, 8
        %s882 = scalar_lea.vmem %s1, %s881
      $region40: #{tpu_custom_call.1} parent=35 // pred_fallthru
        _
      // Predicated region
      $region41: #{tpu_custom_call.1} parent=35 // pred_check
        %p883 = pneg %p108
      $region42: #{tpu_custom_call.1} parent=35 // pred_check_branch
        %885 = sbr.rel (%p883) target = $region44
      $region43: #{tpu_custom_call.1} parent=35 // pred_region
        %p886 = scmp.lt.s32.totalorder %s20, 1
        %s887 = scalar_select %p886, %s20, 1
        %p888 = scmp.lt.s32.totalorder %s21, 0
        %s889 = scalar_select %p888, %s21, 0
        %s890 = smul.addr %s887, 4
        %s891 = sadd.s32 %s889, %s890
        %s892 = smul.addr %s891, 8
        %s893 = scalar_lea.vmem %s2, %s892
      $region44: #{tpu_custom_call.1} parent=35 // pred_fallthru
        _
    $region36: #{tpu_custom_call.1} parent=5 // pred_fallthru
      _
  $region6: #{tpu_custom_call.1} parent=0 // loop_footer
    %s13 = sadd.s32 1, %s9
  $region7: #{tpu_custom_call.1} parent=0 // loop_footer_branch
    %8 = sbr.rel target = $region3
  $region8: #{tpu_custom_call.1} parent=0 // loop_exit
    _

</llo_original>
